<compile_context>
chip_gen: v7x
topology: tpu7x:2x2x1
jax: 0.10.0
libtpu: 0.0.40
codegen_flags: <defaults>
</compile_context>

<pallas_src>
import functools

import jax
import jax.numpy as jnp
from jax.experimental import pallas as pl
from jax.experimental.pallas import tpu as pltpu

_EPS_NORM = 1e-12   # eps used when L2-normalizing feature vectors (F.normalize)
_EPS_MIN = 1e-5     # eps used in the relative-distance normalization


def _cx_dir_kernel(x_ref, y_ref, o_ref, *, bandwidth, strip):
    """One-directional contextual similarity CX(x -> y), one (src, tgt) pair per grid step.

    x_ref, y_ref: (C, HW) VMEM blocks (leading pair dim squeezed away).
    o_ref:        (1, 128) VMEM block; the per-pair CX scalar is broadcast into it.
    """
    hw = x_ref.shape[1]
    inv_bw = 1.0 / bandwidth
    inv_hw = 1.0 / hw

    # ---- target-side preprocessing (loop-invariant) --------------------------------
    y = y_ref[...].astype(jnp.float32)                     # (C, HW)
    mu = jnp.mean(y, axis=1, keepdims=True)                # (C, 1) target's channel-wise spatial mean
    t = y - mu
    # L2-normalize each spatial feature vector (reduce over channels = sublanes);
    # rsqrt goes to the EUP slot instead of VALU divides.
    t_n = t * jax.lax.rsqrt(
        jnp.maximum(jnp.sum(t * t, axis=0, keepdims=True), _EPS_NORM * _EPS_NORM))

    n_strips = hw // strip

    # ---- flash-style sweep over strips of source rows ------------------------------
    def body(i, col_max):
        start = pl.multiple_of(i * strip, strip)
        xs = x_ref[:, pl.ds(start, strip)].astype(jnp.float32)   # (C, strip)
        s = xs - mu
        s_n = s * jax.lax.rsqrt(
            jnp.maximum(jnp.sum(s * s, axis=0, keepdims=True), _EPS_NORM * _EPS_NORM))

        # (strip, HW) cosine similarities: contract over channels (sublane axis) on the MXU.
        sim = jax.lax.dot_general(s_n, t_n, (((0,), (0,)), ((), ())),
                                  preferred_element_type=jnp.float32)

        # Per-row quantities hoisted out of the per-element chain.
        row_max = jnp.max(sim, axis=1, keepdims=True)            # (strip, 1)
        d_min = jnp.maximum(1.0 - row_max, 0.0)                  # clamp: sim can exceed 1 by rounding
        scale_r = pl.reciprocal(d_min + _EPS_MIN, approx=True) * inv_bw
        bias_r = -scale_r
        # exp(offset/bandwidth) cancels against the row sum -> dropped.  One FMA + one exp/elem.
        w = jnp.exp(sim * scale_r + bias_r)                      # (strip, HW)

        inv_rowsum = pl.reciprocal(jnp.sum(w, axis=1, keepdims=True), approx=True)
        cand = jnp.max(w * inv_rowsum, axis=0, keepdims=True)    # (1, HW) max_i CX_ij over this strip
        return jnp.maximum(col_max, cand)

    col_max = jax.lax.fori_loop(0, n_strips, body,
                                jnp.zeros((1, hw), jnp.float32), unroll=True)

    cx = jnp.sum(col_max) * inv_hw                               # mean_j max_i CX_ij
    o_ref[...] = jnp.broadcast_to(cx, o_ref.shape).astype(o_ref.dtype)


def _cx_pairs(src, tgt, *, bandwidth):
    """One-directional CX(src_i -> tgt_i) for a batch of pairs. (P, C, HW) -> (P,)."""
    p_count, c, hw = src.shape
    # Strip of source rows: caps the live (strip, HW) tensors at ~32 vregs and keeps
    # VMEM usage independent of HW (v7x has only 64 MiB VMEM).
    strip = 128 if hw % 128 == 0 else hw
    kern = functools.partial(_cx_dir_kernel, bandwidth=float(bandwidth), strip=int(strip))
    out = pl.pallas_call(
        kern,
        out_shape=jax.ShapeDtypeStruct((p_count, 1, 128), jnp.float32),
        grid_spec=pltpu.PrefetchScalarGridSpec(
            num_scalar_prefetch=0,
            grid=(p_count,),
            in_specs=[pl.BlockSpec((None, c, hw), lambda i: (i, 0, 0)),
                      pl.BlockSpec((None, c, hw), lambda i: (i, 0, 0))],
            out_specs=pl.BlockSpec((None, 1, 128), lambda i: (i, 0, 0)),
        ),
        compiler_params=pltpu.CompilerParams(dimension_semantics=("parallel",)),
    )(src, tgt)
    return out[:, 0, 0]


def _to_flat(feat_nchw):
    """NCHW -> (N, C, HW): lane-dense layout, no transpose pass over HBM."""
    n, c, h, w = feat_nchw.shape
    return feat_nchw.reshape(n, c, h * w)


def contextual_triplet_loss(features, *, margin=0.5, offset=1.0, bandwidth=0.5,
                            sample_numel=64, is_symmetric=True, scale=1, alpha=1.0):
    """Forward pass of ContextualTripletLoss. `features` = (anchors, positives, negatives), NCHW.

    Note: `offset` enters the weights as a constant factor exp(offset/bandwidth) which cancels
    in the row normalization, so it does not affect the loss and is not used by the kernel.
    """
    del sample_numel, scale, offset  # see TODOs at the top of the file
    anchors, positives, negatives = features
    b = anchors.shape[0]

    a = _to_flat(anchors)
    p = _to_flat(positives)
    n = _to_flat(negatives)

    # Pack every similarity pair the loss needs into ONE batch -> one kernel launch.
    src_list = [a, a]          # cx(anchor, positive), cx(anchor, negative)
    tgt_list = [p, n]
    use_seasonal = alpha > 0
    if use_seasonal:
        if b < 2:
            raise ValueError("alpha > 0 (seasonal loss) requires batch size >= 2 "
                             "(same assumption as the PyTorch module).")
        anc = jnp.stack([a[0], p[0], n[0]])
        pos = jnp.stack([a[1], p[1], n[1]])
        neg = jnp.stack([n[0], n[1], a[0]])
        src_list += [anc, anc]  # cx(anc, pos), cx(anc, neg)
        tgt_list += [pos, neg]
    src = jnp.concatenate(src_list, axis=0)
    tgt = jnp.concatenate(tgt_list, axis=0)
    p_base = src.shape[0]

    # Symmetric CX = 0.5 * (CX(x,y) + CX(y,x)); each direction is its own grid step
    # so the "parallel" pair axis feeds both v7x TensorCores evenly.
    if is_symmetric:
        src_all = jnp.concatenate([src, tgt], axis=0)
        tgt_all = jnp.concatenate([tgt, src], axis=0)
    else:
        src_all, tgt_all = src, tgt

    cx_dirs = _cx_pairs(src_all, tgt_all, bandwidth=bandwidth)
    cx = 0.5 * (cx_dirs[:p_base] + cx_dirs[p_base:]) if is_symmetric else cx_dirs

    # Triplet / margin glue in plain JAX (positives should be MORE similar than negatives).
    cx_ap, cx_an = cx[:b], cx[b:2 * b]
    loss = jnp.mean(jnp.maximum(cx_an - cx_ap + margin, 0.0))
    if use_seasonal:
        cx_s_ap, cx_s_an = cx[2 * b:2 * b + 3], cx[2 * b + 3:2 * b + 6]
        loss = loss + alpha * jnp.mean(jnp.maximum(cx_s_an - cx_s_ap + margin, 0.0))
    return loss


if __name__ == "__main__":
    key = jax.random.PRNGKey(0)
    k1, k2, k3 = jax.random.split(key, 3)
    B, C, H, W = 2, 4, 16, 16     # small synthetic shapes consistent with the module
    anchors = jax.random.normal(k1, (B, C, H, W), jnp.float32)
    positives = anchors + 0.1 * jax.random.normal(k2, (B, C, H, W), jnp.float32)
    negatives = jax.random.normal(k3, (B, C, H, W), jnp.float32)

    loss_fn = jax.jit(lambda a, p, n: contextual_triplet_loss(
        (a, p, n), margin=0.5, offset=1.0, bandwidth=0.5,
        sample_numel=64, is_symmetric=True, scale=1, alpha=1.0))
    loss = loss_fn(anchors, positives, negatives)
    jax.block_until_ready(loss)
    assert loss.shape == () and bool(jnp.isfinite(loss))
    print("KERNEL_OK")
</pallas_src>

<mosaic_0001>
module attributes {stable_mosaic.version = 11 : i64} {
  func.func @_cx_dir_kernel(%arg0: i32, %arg1: memref<1x4x256xf32, #tpu.memory_space<vmem>>, %arg2: memref<1x4x256xf32, #tpu.memory_space<vmem>>, %arg3: memref<1x1x128xf32, #tpu.memory_space<vmem>>) attributes {dimension_semantics = [#tpu.dimension_semantics<parallel>], iteration_bounds = array<i64: 20>, scalar_prefetch = 0 : i64, scratch_operands = 0 : i64, tpu.core_type = #tpu.core_type<tc>, window_params = [{transform_indices = @transform_0, window_bounds = array<i64: 1, 4, 256>}, {transform_indices = @transform_1, window_bounds = array<i64: 1, 4, 256>}, {transform_indices = @transform_2, window_bounds = array<i64: 1, 1, 128>}]} {
    %c0 = arith.constant 0 : index
    %c0_0 = arith.constant 0 : index
    %c0_1 = arith.constant 0 : index
    %0 = vector.load %arg2[%c0, %c0_0, %c0_1] : memref<1x4x256xf32, #tpu.memory_space<vmem>>, vector<1x4x256xf32>
    %1 = vector.shape_cast %0 : vector<1x4x256xf32> to vector<4x256xf32>
    %cst = arith.constant dense<0.000000e+00> : vector<4xf32>
    %2 = vector.multi_reduction <add>, %1, %cst [1] : vector<4x256xf32> to vector<4xf32>
    %3 = vector.shape_cast %2 : vector<4xf32> to vector<4x1xf32>
    %cst_2 = arith.constant 2.560000e+02 : f32
    %4 = vector.broadcast %cst_2 : f32 to vector<4x1xf32>
    %5 = arith.divf %3, %4 : vector<4x1xf32>
    %6 = vector.broadcast %5 : vector<4x1xf32> to vector<4x256xf32>
    %7 = arith.subf %1, %6 : vector<4x256xf32>
    %8 = arith.mulf %7, %7 : vector<4x256xf32>
    %cst_3 = arith.constant dense<0.000000e+00> : vector<256xf32>
    %9 = vector.multi_reduction <add>, %8, %cst_3 [0] : vector<4x256xf32> to vector<256xf32>
    %10 = vector.shape_cast %9 : vector<256xf32> to vector<1x256xf32>
    %cst_4 = arith.constant 1.000000e-24 : f32
    %11 = vector.broadcast %cst_4 : f32 to vector<1x256xf32>
    %12 = arith.maximumf %10, %11 : vector<1x256xf32>
    %13 = math.rsqrt %12 : vector<1x256xf32>
    %14 = vector.broadcast %13 : vector<1x256xf32> to vector<4x256xf32>
    %15 = arith.mulf %7, %14 : vector<4x256xf32>
    %cst_5 = arith.constant 0.000000e+00 : f32
    %16 = vector.broadcast %cst_5 : f32 to vector<1x256xf32>
    %c0_i32 = arith.constant 0 : i32
    %c128_i32 = arith.constant 128 : i32
    %17 = arith.muli %c0_i32, %c128_i32 : i32
    %18 = tpu.assume_multiple %17, 128 : i32
    %c0_6 = arith.constant 0 : index
    %c0_7 = arith.constant 0 : index
    %19 = arith.index_cast %18 : i32 to index
    %20 = vector.load %arg1[%c0_6, %c0_7, %19] : memref<1x4x256xf32, #tpu.memory_space<vmem>>, vector<1x4x128xf32>
    %21 = vector.shape_cast %20 : vector<1x4x128xf32> to vector<4x128xf32>
    %22 = vector.broadcast %5 : vector<4x1xf32> to vector<4x128xf32>
    %23 = arith.subf %21, %22 : vector<4x128xf32>
    %24 = arith.mulf %23, %23 : vector<4x128xf32>
    %cst_8 = arith.constant dense<0.000000e+00> : vector<128xf32>
    %25 = vector.multi_reduction <add>, %24, %cst_8 [0] : vector<4x128xf32> to vector<128xf32>
    %26 = vector.shape_cast %25 : vector<128xf32> to vector<1x128xf32>
    %cst_9 = arith.constant 1.000000e-24 : f32
    %27 = vector.broadcast %cst_9 : f32 to vector<1x128xf32>
    %28 = arith.maximumf %26, %27 : vector<1x128xf32>
    %29 = math.rsqrt %28 : vector<1x128xf32>
    %30 = vector.broadcast %29 : vector<1x128xf32> to vector<4x128xf32>
    %31 = arith.mulf %23, %30 : vector<4x128xf32>
    %cst_10 = arith.constant dense<0.000000e+00> : vector<128x256xf32>
    %32 = tpu.matmul %31, %15, %cst_10 {dimension_numbers = #tpu.dot_dimension_numbers<[0], [0], [1], [1], [0, 1, 1, 1], [], []>} : vector<4x128xf32>, vector<4x256xf32>, vector<128x256xf32> -> vector<128x256xf32>
    %cst_11 = arith.constant dense<0xFF800000> : vector<128xf32>
    %33 = vector.multi_reduction <maximumf>, %32, %cst_11 [1] : vector<128x256xf32> to vector<128xf32>
    %34 = vector.shape_cast %33 : vector<128xf32> to vector<128x1xf32>
    %cst_12 = arith.constant 1.000000e+00 : f32
    %35 = vector.broadcast %cst_12 : f32 to vector<128x1xf32>
    %36 = arith.subf %35, %34 : vector<128x1xf32>
    %cst_13 = arith.constant 0.000000e+00 : f32
    %37 = vector.broadcast %cst_13 : f32 to vector<128x1xf32>
    %38 = arith.maximumf %36, %37 : vector<128x1xf32>
    %cst_14 = arith.constant 9.99999974E-6 : f32
    %39 = vector.broadcast %cst_14 : f32 to vector<128x1xf32>
    %40 = arith.addf %38, %39 : vector<128x1xf32>
    %41 = tpu.reciprocal %40 {approx = true} : vector<128x1xf32> -> vector<128x1xf32>
    %cst_15 = arith.constant 2.000000e+00 : f32
    %42 = vector.broadcast %cst_15 : f32 to vector<128x1xf32>
    %43 = arith.mulf %41, %42 : vector<128x1xf32>
    %cst_16 = arith.constant 0.000000e+00 : f32
    %44 = vector.broadcast %cst_16 : f32 to vector<128x1xf32>
    %45 = arith.subf %44, %43 : vector<128x1xf32>
    %46 = vector.broadcast %43 : vector<128x1xf32> to vector<128x256xf32>
    %47 = arith.mulf %32, %46 : vector<128x256xf32>
    %48 = vector.broadcast %45 : vector<128x1xf32> to vector<128x256xf32>
    %49 = arith.addf %47, %48 : vector<128x256xf32>
    %50 = math.exp %49 : vector<128x256xf32>
    %cst_17 = arith.constant dense<0.000000e+00> : vector<128xf32>
    %51 = vector.multi_reduction <add>, %50, %cst_17 [1] : vector<128x256xf32> to vector<128xf32>
    %52 = vector.shape_cast %51 : vector<128xf32> to vector<128x1xf32>
    %53 = tpu.reciprocal %52 {approx = true} : vector<128x1xf32> -> vector<128x1xf32>
    %54 = vector.broadcast %53 : vector<128x1xf32> to vector<128x256xf32>
    %55 = arith.mulf %50, %54 : vector<128x256xf32>
    %cst_18 = arith.constant dense<0xFF800000> : vector<256xf32>
    %56 = vector.multi_reduction <maximumf>, %55, %cst_18 [0] : vector<128x256xf32> to vector<256xf32>
    %57 = vector.shape_cast %56 : vector<256xf32> to vector<1x256xf32>
    %58 = arith.maximumf %16, %57 : vector<1x256xf32>
    %c1_i32 = arith.constant 1 : i32
    %c128_i32_19 = arith.constant 128 : i32
    %59 = arith.muli %c1_i32, %c128_i32_19 : i32
    %60 = tpu.assume_multiple %59, 128 : i32
    %c0_20 = arith.constant 0 : index
    %c0_21 = arith.constant 0 : index
    %61 = arith.index_cast %60 : i32 to index
    %62 = vector.load %arg1[%c0_20, %c0_21, %61] : memref<1x4x256xf32, #tpu.memory_space<vmem>>, vector<1x4x128xf32>
    %63 = vector.shape_cast %62 : vector<1x4x128xf32> to vector<4x128xf32>
    %64 = vector.broadcast %5 : vector<4x1xf32> to vector<4x128xf32>
    %65 = arith.subf %63, %64 : vector<4x128xf32>
    %66 = arith.mulf %65, %65 : vector<4x128xf32>
    %cst_22 = arith.constant dense<0.000000e+00> : vector<128xf32>
    %67 = vector.multi_reduction <add>, %66, %cst_22 [0] : vector<4x128xf32> to vector<128xf32>
    %68 = vector.shape_cast %67 : vector<128xf32> to vector<1x128xf32>
    %cst_23 = arith.constant 1.000000e-24 : f32
    %69 = vector.broadcast %cst_23 : f32 to vector<1x128xf32>
    %70 = arith.maximumf %68, %69 : vector<1x128xf32>
    %71 = math.rsqrt %70 : vector<1x128xf32>
    %72 = vector.broadcast %71 : vector<1x128xf32> to vector<4x128xf32>
    %73 = arith.mulf %65, %72 : vector<4x128xf32>
    %cst_24 = arith.constant dense<0.000000e+00> : vector<128x256xf32>
    %74 = tpu.matmul %73, %15, %cst_24 {dimension_numbers = #tpu.dot_dimension_numbers<[0], [0], [1], [1], [0, 1, 1, 1], [], []>} : vector<4x128xf32>, vector<4x256xf32>, vector<128x256xf32> -> vector<128x256xf32>
    %cst_25 = arith.constant dense<0xFF800000> : vector<128xf32>
    %75 = vector.multi_reduction <maximumf>, %74, %cst_25 [1] : vector<128x256xf32> to vector<128xf32>
    %76 = vector.shape_cast %75 : vector<128xf32> to vector<128x1xf32>
    %cst_26 = arith.constant 1.000000e+00 : f32
    %77 = vector.broadcast %cst_26 : f32 to vector<128x1xf32>
    %78 = arith.subf %77, %76 : vector<128x1xf32>
    %cst_27 = arith.constant 0.000000e+00 : f32
    %79 = vector.broadcast %cst_27 : f32 to vector<128x1xf32>
    %80 = arith.maximumf %78, %79 : vector<128x1xf32>
    %cst_28 = arith.constant 9.99999974E-6 : f32
    %81 = vector.broadcast %cst_28 : f32 to vector<128x1xf32>
    %82 = arith.addf %80, %81 : vector<128x1xf32>
    %83 = tpu.reciprocal %82 {approx = true} : vector<128x1xf32> -> vector<128x1xf32>
    %cst_29 = arith.constant 2.000000e+00 : f32
    %84 = vector.broadcast %cst_29 : f32 to vector<128x1xf32>
    %85 = arith.mulf %83, %84 : vector<128x1xf32>
    %cst_30 = arith.constant 0.000000e+00 : f32
    %86 = vector.broadcast %cst_30 : f32 to vector<128x1xf32>
    %87 = arith.subf %86, %85 : vector<128x1xf32>
    %88 = vector.broadcast %85 : vector<128x1xf32> to vector<128x256xf32>
    %89 = arith.mulf %74, %88 : vector<128x256xf32>
    %90 = vector.broadcast %87 : vector<128x1xf32> to vector<128x256xf32>
    %91 = arith.addf %89, %90 : vector<128x256xf32>
    %92 = math.exp %91 : vector<128x256xf32>
    %cst_31 = arith.constant dense<0.000000e+00> : vector<128xf32>
    %93 = vector.multi_reduction <add>, %92, %cst_31 [1] : vector<128x256xf32> to vector<128xf32>
    %94 = vector.shape_cast %93 : vector<128xf32> to vector<128x1xf32>
    %95 = tpu.reciprocal %94 {approx = true} : vector<128x1xf32> -> vector<128x1xf32>
    %96 = vector.broadcast %95 : vector<128x1xf32> to vector<128x256xf32>
    %97 = arith.mulf %92, %96 : vector<128x256xf32>
    %cst_32 = arith.constant dense<0xFF800000> : vector<256xf32>
    %98 = vector.multi_reduction <maximumf>, %97, %cst_32 [0] : vector<128x256xf32> to vector<256xf32>
    %99 = vector.shape_cast %98 : vector<256xf32> to vector<1x256xf32>
    %100 = arith.maximumf %58, %99 : vector<1x256xf32>
    %c2_i32 = arith.constant 2 : i32
    %101 = vector.shape_cast %100 : vector<1x256xf32> to vector<1x1x256xf32>
    %cst_33 = arith.constant dense<0.000000e+00> : vector<1xf32>
    %102 = vector.multi_reduction <add>, %101, %cst_33 [1, 2] : vector<1x1x256xf32> to vector<1xf32>
    %103 = vector.shape_cast %102 : vector<1xf32> to vector<1x1x1xf32>
    %104 = vector.extract %103[0, 0, 0] : f32 from vector<1x1x1xf32>
    %cst_34 = arith.constant 3.906250e-03 : f32
    %105 = arith.mulf %104, %cst_34 : f32
    %106 = vector.broadcast %105 : f32 to vector<1x128xf32>
    %c0_35 = arith.constant 0 : index
    %c0_36 = arith.constant 0 : index
    %c0_37 = arith.constant 0 : index
    %107 = vector.load %arg3[%c0_35, %c0_36, %c0_37] : memref<1x1x128xf32, #tpu.memory_space<vmem>>, vector<1x1x128xf32>
    %108 = vector.shape_cast %107 : vector<1x1x128xf32> to vector<1x128xf32>
    %109 = vector.shape_cast %106 : vector<1x128xf32> to vector<1x1x128xf32>
    tpu.vector_store %arg3[%c0_35, %c0_36, %c0_37], %109 {strides = array<i32>} : memref<1x1x128xf32, #tpu.memory_space<vmem>>, vector<1x1x128xf32>,
    return
  }
  func.func @transform_0(%arg0: i32) -> (i32, i32, i32) {
    %c0_i32 = arith.constant 0 : i32
    %c0_i32_0 = arith.constant 0 : i32
    %c0_i32_1 = arith.constant 0 : i32
    return %arg0, %c0_i32, %c0_i32_0 : i32, i32, i32
  }
  func.func @transform_1(%arg0: i32) -> (i32, i32, i32) {
    %c0_i32 = arith.constant 0 : i32
    %c0_i32_0 = arith.constant 0 : i32
    %c0_i32_1 = arith.constant 0 : i32
    return %arg0, %c0_i32, %c0_i32_0 : i32, i32, i32
  }
  func.func @transform_2(%arg0: i32) -> (i32, i32, i32) {
    %c0_i32 = arith.constant 0 : i32
    %c0_i32_0 = arith.constant 0 : i32
    %c0_i32_1 = arith.constant 0 : i32
    return %arg0, %c0_i32, %c0_i32_0 : i32, i32, i32
  }
}

</mosaic_0001>

<llo_original>
// kernel: _lambda_.1
$region0: #{_lambda_.1}
  #allocation0 [shape = 'u32[]', space=smem, size = 0x4, offset = 0x4, fixed_abs, tag = 'smem constant byte address 0x4 - core index']
  #allocation1 [shape = 'u32[144,128]{1,0:T(1,128)}', space=vmem, size = 0x12000, scoped, tag = 'internal scratch']
  %s0 = inlined_call_operand.vmem [shape: f32[20,4,256], index: 0, kind: input, shape index: {}]
  %s1 = inlined_call_operand.vmem [shape: f32[20,4,256], index: 1, kind: input, shape index: {}]
  %s2 = inlined_call_operand.vmem [shape: f32[20,1,128], index: 2, kind: output, shape index: {}]
  %s3 = sld [smem:[#allocation0]]
  $region41: #{_lambda_.1} parent=0
    _
  %s5 = ssub.s32 1, %s3
  %s6 = scalar_select 0, %s5, %s3
  loop: start=0, step=1, limit=22
  $region2: #{_lambda_.1} parent=0 // loop_pre_header
    _
  $region3: #{_lambda_.1} parent=0 // loop_header
    %s8 = sphi 0, %s12
    %p9 = scmp.ge.s32.totalorder %s8, 22
    %s18 = sphi 0, %s20
    %s21 = sphi 0, %s18
    %s22 = sphi 0, %s21
    %s38 = sphi 0, %s22
    %s44 = sphi 0, %s46
    %s47 = sphi 0, %s44
    %s48 = sphi 0, %s47
    %s64 = sphi 0, %s48
    %s70 = sphi 0, %s72
    %s73 = sphi 0, %s70
    %s74 = sphi 0, %s73
    %s90 = sphi 0, %s74
  $region4: #{_lambda_.1} parent=0 // loop_header_branch
    %11 = sbr.rel (%p9) target = $region8
  $region5: #{_lambda_.1} parent=0 // loop_body
    %s13 = ssub.s32 %s8, 1
    %s14 = ssub.s32 %s8, 2
    %s15 = sadd.s32 %s8, 1
    %s16 = ssub.s32 %s8, %s15
    %p17 = scmp.eq.s32.totalorder %s16, 0
    %s19 = sadd.s32 %s18, 1
    %s20 = scalar_select %p17, %s18, %s19
    %p23 = pneg %p17
    %p24 = scmp.eq.s32.totalorder %s8, 19
    %p25 = por %p23, %p24
    %p26 = scmp.ne.s32.totalorder %s18, %s21
    %p27 = scmp.eq.s32.totalorder %s8, 0
    %p28 = por %p26, %p27
    %p29 = scmp.ne.s32.totalorder %s18, %s21
    %p30 = scmp.eq.s32.totalorder %s13, 19
    %p31 = por %p29, %p30
    %p32 = scmp.ne.s32.totalorder %s21, %s22
    %p33 = scmp.eq.s32.totalorder %s13, 0
    %p34 = por %p32, %p33
    %p35 = scmp.ne.s32.totalorder %s21, %s22
    %p36 = scmp.eq.s32.totalorder %s14, 19
    %p37 = por %p35, %p36
    %p39 = scmp.ne.s32.totalorder %s22, %s38
    %p40 = scmp.eq.s32.totalorder %s14, 0
    %p41 = por %p39, %p40
    %s42 = ssub.s32 %s8, %s15
    %p43 = scmp.eq.s32.totalorder %s42, 0
    %s45 = sadd.s32 %s44, 1
    %s46 = scalar_select %p43, %s44, %s45
    %p49 = pneg %p43
    %p50 = scmp.eq.s32.totalorder %s8, 19
    %p51 = por %p49, %p50
    %p52 = scmp.ne.s32.totalorder %s44, %s47
    %p53 = scmp.eq.s32.totalorder %s8, 0
    %p54 = por %p52, %p53
    %p55 = scmp.ne.s32.totalorder %s44, %s47
    %p56 = scmp.eq.s32.totalorder %s13, 19
    %p57 = por %p55, %p56
    %p58 = scmp.ne.s32.totalorder %s47, %s48
    %p59 = scmp.eq.s32.totalorder %s13, 0
    %p60 = por %p58, %p59
    %p61 = scmp.ne.s32.totalorder %s47, %s48
    %p62 = scmp.eq.s32.totalorder %s14, 19
    %p63 = por %p61, %p62
    %p65 = scmp.ne.s32.totalorder %s48, %s64
    %p66 = scmp.eq.s32.totalorder %s14, 0
    %p67 = por %p65, %p66
    %s68 = ssub.s32 %s8, %s15
    %p69 = scmp.eq.s32.totalorder %s68, 0
    %s71 = sadd.s32 %s70, 1
    %s72 = scalar_select %p69, %s70, %s71
    %p75 = pneg %p69
    %p76 = scmp.eq.s32.totalorder %s8, 19
    %p77 = por %p75, %p76
    %p78 = scmp.ne.s32.totalorder %s70, %s73
    %p79 = scmp.eq.s32.totalorder %s8, 0
    %p80 = por %p78, %p79
    %p81 = scmp.ne.s32.totalorder %s70, %s73
    %p82 = scmp.eq.s32.totalorder %s13, 19
    %p83 = por %p81, %p82
    %p84 = scmp.ne.s32.totalorder %s73, %s74
    %p85 = scmp.eq.s32.totalorder %s13, 0
    %p86 = por %p84, %p85
    %p87 = scmp.ne.s32.totalorder %s73, %s74
    %p88 = scmp.eq.s32.totalorder %s14, 19
    %p89 = por %p87, %p88
    %p91 = scmp.ne.s32.totalorder %s74, %s90
    %p92 = scmp.eq.s32.totalorder %s14, 0
    %p93 = por %p91, %p92
    %p94 = scmp.le.s32.totalorder 1, %s8
    %p95 = scmp.lt.s32.totalorder %s8, 21
    %p96 = pnand %p94, %p95
    %p97 = pneg %p96
    // Predicated region
    $region9: #{_lambda_.1} parent=5 // pred_check
      _
    $region10: #{_lambda_.1} parent=5 // pred_check_branch
      %99 = sbr.rel (%p96) target = $region12
    $region11: #{_lambda_.1} parent=5 // pred_region
      %s100 = ssub.s32 %s8, 1
    $region12: #{_lambda_.1} parent=5 // pred_fallthru
      _
    %p101 = scmp.lt.s32.totalorder %s8, 20
    // Predicated region
    $region13: #{_lambda_.1} parent=5 // pred_check
      %p102 = pneg %p101
    $region14: #{_lambda_.1} parent=5 // pred_check_branch
      %104 = sbr.rel (%p102) target = $region16
    $region15: #{_lambda_.1} parent=5 // pred_region
      // Predicated region
      $region17: #{_lambda_.1} parent=15 // pred_check
        %p105 = pneg %p28
      $region18: #{_lambda_.1} parent=15 // pred_check_branch
        %107 = sbr.rel (%p105) target = $region20
      $region19: #{_lambda_.1} parent=15 // pred_region
        %p108 = scmp.lt.s32.totalorder %s8, 19
        %s109 = scalar_select %p108, %s8, 19
        %s110 = smul.addr %s109, 2
        %s111 = smul.addr %s110, 4
        %s112 = scalar_lea.vmem %s0, %s111
      $region20: #{_lambda_.1} parent=15 // pred_fallthru
        _
      // Predicated region
      $region21: #{_lambda_.1} parent=15 // pred_check
        %p113 = pneg %p54
      $region22: #{_lambda_.1} parent=15 // pred_check_branch
        %115 = sbr.rel (%p113) target = $region24
      $region23: #{_lambda_.1} parent=15 // pred_region
        %p116 = scmp.lt.s32.totalorder %s8, 19
        %s117 = scalar_select %p116, %s8, 19
        %s118 = smul.addr %s117, 2
        %s119 = smul.addr %s118, 4
        %s120 = scalar_lea.vmem %s1, %s119
      $region24: #{_lambda_.1} parent=15 // pred_fallthru
        _
    $region16: #{_lambda_.1} parent=5 // pred_fallthru
      _
    %p121 = scmp.le.s32.totalorder 1, %s8
    %p122 = scmp.lt.s32.totalorder %s8, 21
    %p123 = pnand %p121, %p122
    %p124 = pneg %p123
    // Predicated region
    $region25: #{_lambda_.1} parent=5 // pred_check
      _
    $region26: #{_lambda_.1} parent=5 // pred_check_branch
      %126 = sbr.rel (%p123) target = $region28
    $region27: #{_lambda_.1} parent=5 // pred_region
      %s127 = ssub.s32 %s8, 1
      %p128 = scmp.lt.s32.totalorder %s13, 19
      %s129 = scalar_select %p128, %s13, 19
      %s130 = smul.addr %s129, 2
      %s131 = smul.addr %s130, 4
      %s132 = scalar_lea.vmem %s0, %s131
      %p133 = pneg %p34
      %p134 = pneg %p31
      %p135 = scmp.lt.s32.totalorder %s13, 19
      %s136 = scalar_select %p135, %s13, 19
      %s137 = smul.addr %s136, 2
      %s138 = smul.addr %s137, 4
      %s139 = scalar_lea.vmem %s1, %s138
      %p140 = pneg %p60
      %p141 = pneg %p57
      %p142 = pneg %p86
      %p143 = pneg %p83
      %p144 = scmp.lt.s32.totalorder %s13, 19
      %s145 = scalar_select %p144, %s13, 19
      %s146 = scalar_lea.vmem %s2, %s145
      %p147 = scmp.lt.s32.totalorder %s13, 19
      %s148 = scalar_select %p147, %s13, 19
      %s149 = smul.addr %s148, 2
      %s150 = smul.addr %s149, 4
      %s151 = scalar_lea.vmem %s0, %s150
      %p152 = scmp.lt.s32.totalorder %s13, 19
      %s153 = scalar_select %p152, %s13, 19
      %s154 = smul.addr %s153, 2
      %s155 = smul.addr %s154, 4
      %s156 = scalar_lea.vmem %s1, %s155
      %p157 = scmp.lt.s32.totalorder %s13, 19
      %s158 = scalar_select %p157, %s13, 19
      %s159 = scalar_lea.vmem %s2, %s158
      %v160 = vld [vmem:[%s156] sm:$0xff]
      %v162 = vcombine.high %v160, %v160
      %vm164 = vcmask 1043456
      %v165 = vsel %vm164, %v160, 0.0
      %v166 = vsel %vm164, %v162, 0.0
      %v167 = vadd.f32 %v165, %v166
      %168 = vadd.xlane.f32.xlu0 %v167
      %v169 = vpop.xlane.xlu0 %168
      %v170 = vrcp.pop 256.0
      %v171 = vmul.f32 %v169, %v170
      %v174 = vunpack.c.l.s4 839922192
      %v175 = vunpack.c.0.s8 %v174
      %v176 = vlaneseq
      %v177 = vshrl.u32 %v176, 7
      %v178 = vsub.s32 %v175, %v177
      %v179 = vrot.slane %v171, %v178
      %v181 = vsub.f32 %v160, %v179
      %v182 = vmul.f32 %v181, %v181
      %v184 = vcombine.high %v182, %v182
      %v186 = vsel %vm164, %v182, 0.0
      %v187 = vrot.slane %v186, 4
      %v188 = vadd.f32 %v186, %v187
      %v189 = vrot.slane %v188, 2
      %v190 = vadd.f32 %v188, %v189
      %v191 = vrot.slane %v190, 1
      %v192 = vadd.f32 %v190, %v191
      %v193 = vsel %vm164, %v184, 0.0
      %v194 = vrot.slane %v193, 4
      %v195 = vadd.f32 %v193, %v194
      %v196 = vrot.slane %v195, 2
      %v197 = vadd.f32 %v195, %v196
      %v198 = vrot.slane %v197, 1
      %v199 = vadd.f32 %v197, %v198
      %v200 = vmax.f32 %v192, 1e-24
      %v201 = vmax.f32 %v199, 1e-24
      %v202 = vrsqrt.pop %v200
      %v203 = vrsqrt.pop %v201
      %v206 = vcombine.low %v202, %v203
      %v208 = vmul.f32 %v181, %v206
      %v209 = vld [vmem:[%s151] sm:$0xf]
      %v210 = vsub.f32 %v209, %v171
      %v211 = vmul.f32 %v210, %v210
      %v212 = vsel %vm164, %v211, 0.0
      %v213 = vrot.slane %v212, 4
      %v214 = vadd.f32 %v212, %v213
      %v215 = vrot.slane %v214, 2
      %v216 = vadd.f32 %v214, %v215
      %v217 = vrot.slane %v216, 1
      %v218 = vadd.f32 %v216, %v217
      %v219 = vmax.f32 %v218, 1e-24
      %v220 = vrsqrt.pop %v219
      %v221 = vmul.f32 %v210, %v220
      %222 = vxpose.xlu0.b32.start [1/16] %v221, 128
      %223 = vxpose.xlu0.b32.cont [2/16] 0.0, 128
      %224 = vxpose.xlu0.b32.cont [3/16] 0.0, 128
      %225 = vxpose.xlu0.b32.cont [4/16] 0.0, 128
      %226 = vxpose.xlu0.b32.cont [5/16] 0.0, 128
      %227 = vxpose.xlu0.b32.cont [6/16] 0.0, 128
      %228 = vxpose.xlu0.b32.cont [7/16] 0.0, 128
      %229 = vxpose.xlu0.b32.cont [8/16] 0.0, 128
      %230 = vxpose.xlu0.b32.cont [9/16] 0.0, 128
      %231 = vxpose.xlu0.b32.cont [10/16] 0.0, 128
      %232 = vxpose.xlu0.b32.cont [11/16] 0.0, 128
      %233 = vxpose.xlu0.b32.cont [12/16] 0.0, 128
      %234 = vxpose.xlu0.b32.cont [13/16] 0.0, 128
      %235 = vxpose.xlu0.b32.cont [14/16] 0.0, 128
      %236 = vxpose.xlu0.b32.cont [15/16] 0.0, 128
      %237 = vxpose.xlu0.b32.end [16/16] 0.0, 128
      %v238 = vpop.trf.xlu0
      %v239 = vpop.trf.xlu0
      %v240 = vpop.trf.xlu0
      %v241 = vpop.trf.xlu0
      %v242 = vpop.trf.xlu0
      %v243 = vpop.trf.xlu0
      %v244 = vpop.trf.xlu0
      %v245 = vpop.trf.xlu0
      %v246 = vpop.trf.xlu0
      %v247 = vpop.trf.xlu0
      %v248 = vpop.trf.xlu0
      %v249 = vpop.trf.xlu0
      %v250 = vpop.trf.xlu0
      %v251 = vpop.trf.xlu0
      %v252 = vpop.trf.xlu0
      %v253 = vpop.trf.xlu0
      %v255 = vcombine.high %v208, %v208
      %vm256 = vcmask 31744
      %v258 = vsel %vm256, %v238, 0
      %v261 = vsel %vm256, %v239, 0
      %v264 = vsel %vm256, %v240, 0
      %v267 = vsel %vm256, %v241, 0
      %v270 = vsel %vm256, %v242, 0
      %v273 = vsel %vm256, %v243, 0
      %v276 = vsel %vm256, %v244, 0
      %v279 = vsel %vm256, %v245, 0
      %v282 = vsel %vm256, %v246, 0
      %v285 = vsel %vm256, %v247, 0
      %v288 = vsel %vm256, %v248, 0
      %v291 = vsel %vm256, %v249, 0
      %v294 = vsel %vm256, %v250, 0
      %v297 = vsel %vm256, %v251, 0
      %v300 = vsel %vm256, %v252, 0
      %v303 = vsel %vm256, %v253, 0
      %v305 = vsel %vm164, %v208, 0
      %v307 = vsel %vm164, %v255, 0
      %309 = vmatprep.subr.mxu0 %v307
      %310 = vmatpush1.msra.mxu0 %v305
      %311 = vmatprep.subr.mxu0 0.0
      %312 = vmatpush1.msra.mxu0 0.0
      %313 = vmatprep.subr.mxu0 0.0
      %314 = vmatpush1.msra.mxu0 0.0
      %315 = vmatprep.subr.mxu0 0.0
      %316 = vmatpush1.msra.mxu0 0.0
      %317 = vmatprep.subr.mxu0 0.0
      %318 = vmatpush1.msra.mxu0 0.0
      %319 = vmatprep.subr.mxu0 0.0
      %320 = vmatpush1.msra.mxu0 0.0
      %321 = vmatprep.subr.mxu0 0.0
      %322 = vmatpush1.msra.mxu0 0.0
      %323 = vmatprep.subr.mxu0 0.0
      %324 = vmatpush1.msra.mxu0 0.0
      %325 = vmatprep.subr.mxu0 0.0
      %326 = vmatpush1.msra.mxu0 0.0
      %327 = vmatprep.subr.mxu0 0.0
      %328 = vmatpush1.msra.mxu0 0.0
      %329 = vmatprep.subr.mxu0 0.0
      %330 = vmatpush1.msra.mxu0 0.0
      %331 = vmatprep.subr.mxu0 0.0
      %332 = vmatpush1.msra.mxu0 0.0
      %333 = vmatprep.subr.mxu0 0.0
      %334 = vmatpush1.msra.mxu0 0.0
      %335 = vmatprep.subr.mxu0 0.0
      %336 = vmatpush1.msra.mxu0 0.0
      %337 = vmatprep.subr.mxu0 0.0
      %338 = vmatpush1.msra.mxu0 0.0
      %339 = vmatprep.subr.mxu0 0.0
      %340 = vmatpush1.msra.mxu0 0.0
      %341 = vmatprep.subr.mxu0 0.0
      %342 = vmatpush1.msra.mxu0 0.0
      %343 = vmatprep.subr.mxu0 0.0
      %344 = vmatpush1.msra.mxu0 0.0
      %345 = vmatprep.subr.mxu0 0.0
      %346 = vmatpush1.msra.mxu0 0.0
      %347 = vmatprep.subr.mxu0 0.0
      %348 = vmatpush1.msra.mxu0 0.0
      %349 = vmatprep.subr.mxu0 0.0
      %350 = vmatpush1.msra.mxu0 0.0
      %351 = vmatprep.subr.mxu0 0.0
      %352 = vmatpush1.msra.mxu0 0.0
      %353 = vmatprep.subr.mxu0 0.0
      %354 = vmatpush1.msra.mxu0 0.0
      %355 = vmatprep.subr.mxu0 0.0
      %356 = vmatpush1.msra.mxu0 0.0
      %357 = vmatprep.subr.mxu0 0.0
      %358 = vmatpush1.msra.mxu0 0.0
      %359 = vmatprep.subr.mxu0 0.0
      %360 = vmatpush1.msra.mxu0 0.0
      %361 = vmatprep.subr.mxu0 0.0
      %362 = vmatpush1.msra.mxu0 0.0
      %363 = vmatprep.subr.mxu0 0.0
      %364 = vmatpush1.msra.mxu0 0.0
      %365 = vmatprep.subr.mxu0 0.0
      %366 = vmatpush1.msra.mxu0 0.0
      %367 = vmatprep.subr.mxu0 0.0
      %368 = vmatpush1.msra.mxu0 0.0
      %369 = vmatprep.subr.mxu0 0.0
      %370 = vmatpush1.msra.mxu0 0.0
      %371 = vmatprep.subr.mxu0 0.0
      %372 = vmatpush1.msra.mxu0 0.0
      %373 = vmatprep.mubr.f32.mxu0 0.0
      %374 = vmatmul.mubr.f32.gmra.mrb[0].mxu0 %v258
      %v375 = vpop.f32.mrb[0].mxu0
      %v376 = vadd.f32 0.0, %v375
      %v377 = vpop.f32.mrb[0].mxu0
      %v378 = vadd.f32 0.0, %v377
      %379 = vmatprep.mubr.f32.mxu0 0.0
      %380 = vmatmul.mubr.f32.gmra.mrb[0].mxu0 %v261
      %v381 = vpop.f32.mrb[0].mxu0
      %v382 = vadd.f32 0.0, %v381
      %v383 = vpop.f32.mrb[0].mxu0
      %v384 = vadd.f32 0.0, %v383
      %385 = vmatprep.mubr.f32.mxu0 0.0
      %386 = vmatmul.mubr.f32.gmra.mrb[0].mxu0 %v264
      %v387 = vpop.f32.mrb[0].mxu0
      %v388 = vadd.f32 0.0, %v387
      %v389 = vpop.f32.mrb[0].mxu0
      %v390 = vadd.f32 0.0, %v389
      %391 = vmatprep.mubr.f32.mxu0 0.0
      %392 = vmatmul.mubr.f32.gmra.mrb[0].mxu0 %v267
      %v393 = vpop.f32.mrb[0].mxu0
      %v394 = vadd.f32 0.0, %v393
      %v395 = vpop.f32.mrb[0].mxu0
      %v396 = vadd.f32 0.0, %v395
      %397 = vmatprep.mubr.f32.mxu0 0.0
      %398 = vmatmul.mubr.f32.gmra.mrb[0].mxu0 %v270
      %v399 = vpop.f32.mrb[0].mxu0
      %v400 = vadd.f32 0.0, %v399
      %v401 = vpop.f32.mrb[0].mxu0
      %v402 = vadd.f32 0.0, %v401
      %403 = vmatprep.mubr.f32.mxu0 0.0
      %404 = vmatmul.mubr.f32.gmra.mrb[0].mxu0 %v273
      %v405 = vpop.f32.mrb[0].mxu0
      %v406 = vadd.f32 0.0, %v405
      %v407 = vpop.f32.mrb[0].mxu0
      %v408 = vadd.f32 0.0, %v407
      %409 = vmatprep.mubr.f32.mxu0 0.0
      %410 = vmatmul.mubr.f32.gmra.mrb[0].mxu0 %v276
      %v411 = vpop.f32.mrb[0].mxu0
      %v412 = vadd.f32 0.0, %v411
      %v413 = vpop.f32.mrb[0].mxu0
      %v414 = vadd.f32 0.0, %v413
      %415 = vmatprep.mubr.f32.mxu0 0.0
      %416 = vmatmul.mubr.f32.gmra.mrb[0].mxu0 %v279
      %v417 = vpop.f32.mrb[0].mxu0
      %v418 = vadd.f32 0.0, %v417
      %v419 = vpop.f32.mrb[0].mxu0
      %v420 = vadd.f32 0.0, %v419
      %421 = vmatprep.mubr.f32.mxu0 0.0
      %422 = vmatmul.mubr.f32.gmra.mrb[0].mxu0 %v282
      %v423 = vpop.f32.mrb[0].mxu0
      %v424 = vadd.f32 0.0, %v423
      %v425 = vpop.f32.mrb[0].mxu0
      %v426 = vadd.f32 0.0, %v425
      %427 = vmatprep.mubr.f32.mxu0 0.0
      %428 = vmatmul.mubr.f32.gmra.mrb[0].mxu0 %v285
      %v429 = vpop.f32.mrb[0].mxu0
      %v430 = vadd.f32 0.0, %v429
      %v431 = vpop.f32.mrb[0].mxu0
      %v432 = vadd.f32 0.0, %v431
      %433 = vmatprep.mubr.f32.mxu0 0.0
      %434 = vmatmul.mubr.f32.gmra.mrb[0].mxu0 %v288
      %v435 = vpop.f32.mrb[0].mxu0
      %v436 = vadd.f32 0.0, %v435
      %v437 = vpop.f32.mrb[0].mxu0
      %v438 = vadd.f32 0.0, %v437
      %439 = vmatprep.mubr.f32.mxu0 0.0
      %440 = vmatmul.mubr.f32.gmra.mrb[0].mxu0 %v291
      %v441 = vpop.f32.mrb[0].mxu0
      %v442 = vadd.f32 0.0, %v441
      %v443 = vpop.f32.mrb[0].mxu0
      %v444 = vadd.f32 0.0, %v443
      %445 = vmatprep.mubr.f32.mxu0 0.0
      %446 = vmatmul.mubr.f32.gmra.mrb[0].mxu0 %v294
      %v447 = vpop.f32.mrb[0].mxu0
      %v448 = vadd.f32 0.0, %v447
      %v449 = vpop.f32.mrb[0].mxu0
      %v450 = vadd.f32 0.0, %v449
      %451 = vmatprep.mubr.f32.mxu0 0.0
      %452 = vmatmul.mubr.f32.gmra.mrb[0].mxu0 %v297
      %v453 = vpop.f32.mrb[0].mxu0
      %v454 = vadd.f32 0.0, %v453
      %v455 = vpop.f32.mrb[0].mxu0
      %v456 = vadd.f32 0.0, %v455
      %457 = vmatprep.mubr.f32.mxu0 0.0
      %458 = vmatmul.mubr.f32.gmra.mrb[0].mxu0 %v300
      %v459 = vpop.f32.mrb[0].mxu0
      %v460 = vadd.f32 0.0, %v459
      %v461 = vpop.f32.mrb[0].mxu0
      %v462 = vadd.f32 0.0, %v461
      %463 = vmatprep.mubr.f32.mxu0 0.0
      %464 = vmatmul.mubr.f32.gmra.mrb[0].mxu0 %v303
      %v465 = vpop.f32.mrb[0].mxu0
      %v466 = vadd.f32 0.0, %v465
      %v467 = vpop.f32.mrb[0].mxu0
      %v468 = vadd.f32 0.0, %v467
      %469 = vdwg.mxu0
      %v470 = vmax.f32 %v376, %v378
      %471 = vmax.xlane.f32.xlu0 %v470
      %v472 = vpop.xlane.xlu0 %471
      %v473 = vmax.f32 %v382, %v384
      %474 = vmax.xlane.f32.xlu0 %v473
      %v475 = vpop.xlane.xlu0 %474
      %v476 = vmax.f32 %v388, %v390
      %477 = vmax.xlane.f32.xlu0 %v476
      %v478 = vpop.xlane.xlu0 %477
      %v479 = vmax.f32 %v394, %v396
      %480 = vmax.xlane.f32.xlu0 %v479
      %v481 = vpop.xlane.xlu0 %480
      %v482 = vmax.f32 %v400, %v402
      %483 = vmax.xlane.f32.xlu0 %v482
      %v484 = vpop.xlane.xlu0 %483
      %v485 = vmax.f32 %v406, %v408
      %486 = vmax.xlane.f32.xlu0 %v485
      %v487 = vpop.xlane.xlu0 %486
      %v488 = vmax.f32 %v412, %v414
      %489 = vmax.xlane.f32.xlu0 %v488
      %v490 = vpop.xlane.xlu0 %489
      %v491 = vmax.f32 %v418, %v420
      %492 = vmax.xlane.f32.xlu0 %v491
      %v493 = vpop.xlane.xlu0 %492
      %v494 = vmax.f32 %v424, %v426
      %495 = vmax.xlane.f32.xlu0 %v494
      %v496 = vpop.xlane.xlu0 %495
      %v497 = vmax.f32 %v430, %v432
      %498 = vmax.xlane.f32.xlu0 %v497
      %v499 = vpop.xlane.xlu0 %498
      %v500 = vmax.f32 %v436, %v438
      %501 = vmax.xlane.f32.xlu0 %v500
      %v502 = vpop.xlane.xlu0 %501
      %v503 = vmax.f32 %v442, %v444
      %504 = vmax.xlane.f32.xlu0 %v503
      %v505 = vpop.xlane.xlu0 %504
      %v506 = vmax.f32 %v448, %v450
      %507 = vmax.xlane.f32.xlu0 %v506
      %v508 = vpop.xlane.xlu0 %507
      %v509 = vmax.f32 %v454, %v456
      %510 = vmax.xlane.f32.xlu0 %v509
      %v511 = vpop.xlane.xlu0 %510
      %v512 = vmax.f32 %v460, %v462
      %513 = vmax.xlane.f32.xlu0 %v512
      %v514 = vpop.xlane.xlu0 %513
      %v515 = vmax.f32 %v466, %v468
      %516 = vmax.xlane.f32.xlu0 %v515
      %v517 = vpop.xlane.xlu0 %516
      %v518 = vsub.f32 1.0, %v472
      %v519 = vsub.f32 1.0, %v475
      %v520 = vsub.f32 1.0, %v478
      %v521 = vsub.f32 1.0, %v481
      %v522 = vsub.f32 1.0, %v484
      %v523 = vsub.f32 1.0, %v487
      %v524 = vsub.f32 1.0, %v490
      %v525 = vsub.f32 1.0, %v493
      %v526 = vsub.f32 1.0, %v496
      %v527 = vsub.f32 1.0, %v499
      %v528 = vsub.f32 1.0, %v502
      %v529 = vsub.f32 1.0, %v505
      %v530 = vsub.f32 1.0, %v508
      %v531 = vsub.f32 1.0, %v511
      %v532 = vsub.f32 1.0, %v514
      %v533 = vsub.f32 1.0, %v517
      %v534 = vmax.f32 %v518, 0.0
      %v535 = vmax.f32 %v519, 0.0
      %v536 = vmax.f32 %v520, 0.0
      %v537 = vmax.f32 %v521, 0.0
      %v538 = vmax.f32 %v522, 0.0
      %v539 = vmax.f32 %v523, 0.0
      %v540 = vmax.f32 %v524, 0.0
      %v541 = vmax.f32 %v525, 0.0
      %v542 = vmax.f32 %v526, 0.0
      %v543 = vmax.f32 %v527, 0.0
      %v544 = vmax.f32 %v528, 0.0
      %v545 = vmax.f32 %v529, 0.0
      %v546 = vmax.f32 %v530, 0.0
      %v547 = vmax.f32 %v531, 0.0
      %v548 = vmax.f32 %v532, 0.0
      %v549 = vmax.f32 %v533, 0.0
      %v550 = vadd.f32 %v534, 1e-05
      %v551 = vadd.f32 %v535, 1e-05
      %v552 = vadd.f32 %v536, 1e-05
      %v553 = vadd.f32 %v537, 1e-05
      %v554 = vadd.f32 %v538, 1e-05
      %v555 = vadd.f32 %v539, 1e-05
      %v556 = vadd.f32 %v540, 1e-05
      %v557 = vadd.f32 %v541, 1e-05
      %v558 = vadd.f32 %v542, 1e-05
      %v559 = vadd.f32 %v543, 1e-05
      %v560 = vadd.f32 %v544, 1e-05
      %v561 = vadd.f32 %v545, 1e-05
      %v562 = vadd.f32 %v546, 1e-05
      %v563 = vadd.f32 %v547, 1e-05
      %v564 = vadd.f32 %v548, 1e-05
      %v565 = vadd.f32 %v549, 1e-05
      %v566 = vrcp.pop %v550
      %v567 = vrcp.pop %v551
      %v568 = vrcp.pop %v552
      %v569 = vrcp.pop %v553
      %v570 = vrcp.pop %v554
      %v571 = vrcp.pop %v555
      %v572 = vrcp.pop %v556
      %v573 = vrcp.pop %v557
      %v574 = vrcp.pop %v558
      %v575 = vrcp.pop %v559
      %v576 = vrcp.pop %v560
      %v577 = vrcp.pop %v561
      %v578 = vrcp.pop %v562
      %v579 = vrcp.pop %v563
      %v580 = vrcp.pop %v564
      %v581 = vrcp.pop %v565
      %v582 = vmul.f32 %v566, 2.0
      %v583 = vmul.f32 %v567, 2.0
      %v584 = vmul.f32 %v568, 2.0
      %v585 = vmul.f32 %v569, 2.0
      %v586 = vmul.f32 %v570, 2.0
      %v587 = vmul.f32 %v571, 2.0
      %v588 = vmul.f32 %v572, 2.0
      %v589 = vmul.f32 %v573, 2.0
      %v590 = vmul.f32 %v574, 2.0
      %v591 = vmul.f32 %v575, 2.0
      %v592 = vmul.f32 %v576, 2.0
      %v593 = vmul.f32 %v577, 2.0
      %v594 = vmul.f32 %v578, 2.0
      %v595 = vmul.f32 %v579, 2.0
      %v596 = vmul.f32 %v580, 2.0
      %v597 = vmul.f32 %v581, 2.0
      %v598 = vsub.f32 0.0, %v582
      %v599 = vsub.f32 0.0, %v583
      %v600 = vsub.f32 0.0, %v584
      %v601 = vsub.f32 0.0, %v585
      %v602 = vsub.f32 0.0, %v586
      %v603 = vsub.f32 0.0, %v587
      %v604 = vsub.f32 0.0, %v588
      %v605 = vsub.f32 0.0, %v589
      %v606 = vsub.f32 0.0, %v590
      %v607 = vsub.f32 0.0, %v591
      %v608 = vsub.f32 0.0, %v592
      %v609 = vsub.f32 0.0, %v593
      %v610 = vsub.f32 0.0, %v594
      %v611 = vsub.f32 0.0, %v595
      %v612 = vsub.f32 0.0, %v596
      %v613 = vsub.f32 0.0, %v597
      %v614 = vmul.f32 %v376, %v582
      %v615 = vmul.f32 %v378, %v582
      %v616 = vmul.f32 %v382, %v583
      %v617 = vmul.f32 %v384, %v583
      %v618 = vmul.f32 %v388, %v584
      %v619 = vmul.f32 %v390, %v584
      %v620 = vmul.f32 %v394, %v585
      %v621 = vmul.f32 %v396, %v585
      %v622 = vmul.f32 %v400, %v586
      %v623 = vmul.f32 %v402, %v586
      %v624 = vmul.f32 %v406, %v587
      %v625 = vmul.f32 %v408, %v587
      %v626 = vmul.f32 %v412, %v588
      %v627 = vmul.f32 %v414, %v588
      %v628 = vmul.f32 %v418, %v589
      %v629 = vmul.f32 %v420, %v589
      %v630 = vmul.f32 %v424, %v590
      %v631 = vmul.f32 %v426, %v590
      %v632 = vmul.f32 %v430, %v591
      %v633 = vmul.f32 %v432, %v591
      %v634 = vmul.f32 %v436, %v592
      %v635 = vmul.f32 %v438, %v592
      %v636 = vmul.f32 %v442, %v593
      %v637 = vmul.f32 %v444, %v593
      %v638 = vmul.f32 %v448, %v594
      %v639 = vmul.f32 %v450, %v594
      %v640 = vmul.f32 %v454, %v595
      %v641 = vmul.f32 %v456, %v595
      %v642 = vmul.f32 %v460, %v596
      %v643 = vmul.f32 %v462, %v596
      %v644 = vmul.f32 %v466, %v597
      %v645 = vmul.f32 %v468, %v597
      %v646 = vadd.f32 %v614, %v598
      %v647 = vadd.f32 %v615, %v598
      %v648 = vadd.f32 %v616, %v599
      %v649 = vadd.f32 %v617, %v599
      %v650 = vadd.f32 %v618, %v600
      %v651 = vadd.f32 %v619, %v600
      %v652 = vadd.f32 %v620, %v601
      %v653 = vadd.f32 %v621, %v601
      %v654 = vadd.f32 %v622, %v602
      %v655 = vadd.f32 %v623, %v602
      %v656 = vadd.f32 %v624, %v603
      %v657 = vadd.f32 %v625, %v603
      %v658 = vadd.f32 %v626, %v604
      %v659 = vadd.f32 %v627, %v604
      %v660 = vadd.f32 %v628, %v605
      %v661 = vadd.f32 %v629, %v605
      %v662 = vadd.f32 %v630, %v606
      %v663 = vadd.f32 %v631, %v606
      %v664 = vadd.f32 %v632, %v607
      %v665 = vadd.f32 %v633, %v607
      %v666 = vadd.f32 %v634, %v608
      %v667 = vadd.f32 %v635, %v608
      %v668 = vadd.f32 %v636, %v609
      %v669 = vadd.f32 %v637, %v609
      %v670 = vadd.f32 %v638, %v610
      %v671 = vadd.f32 %v639, %v610
      %v672 = vadd.f32 %v640, %v611
      %v673 = vadd.f32 %v641, %v611
      %v674 = vadd.f32 %v642, %v612
      %v675 = vadd.f32 %v643, %v612
      %v676 = vadd.f32 %v644, %v613
      %v677 = vadd.f32 %v645, %v613
      %v678 = vmul.f32 %v646, 1.442695
      %v679 = vpow.pop %v678
      %v680 = vmul.f32 %v647, 1.442695
      %v681 = vpow.pop %v680
      %v682 = vmul.f32 %v648, 1.442695
      %v683 = vpow.pop %v682
      %v684 = vmul.f32 %v649, 1.442695
      %v685 = vpow.pop %v684
      %v686 = vmul.f32 %v650, 1.442695
      %v687 = vpow.pop %v686
      %v688 = vmul.f32 %v651, 1.442695
      %v689 = vpow.pop %v688
      %v690 = vmul.f32 %v652, 1.442695
      %v691 = vpow.pop %v690
      %v692 = vmul.f32 %v653, 1.442695
      %v693 = vpow.pop %v692
      %v694 = vmul.f32 %v654, 1.442695
      %v695 = vpow.pop %v694
      %v696 = vmul.f32 %v655, 1.442695
      %v697 = vpow.pop %v696
      %v698 = vmul.f32 %v656, 1.442695
      %v699 = vpow.pop %v698
      %v700 = vmul.f32 %v657, 1.442695
      %v701 = vpow.pop %v700
      %v702 = vmul.f32 %v658, 1.442695
      %v703 = vpow.pop %v702
      %v704 = vmul.f32 %v659, 1.442695
      %v705 = vpow.pop %v704
      %v706 = vmul.f32 %v660, 1.442695
      %v707 = vpow.pop %v706
      %v708 = vmul.f32 %v661, 1.442695
      %v709 = vpow.pop %v708
      %v710 = vmul.f32 %v662, 1.442695
      %v711 = vpow.pop %v710
      %v712 = vmul.f32 %v663, 1.442695
      %v713 = vpow.pop %v712
      %v714 = vmul.f32 %v664, 1.442695
      %v715 = vpow.pop %v714
      %v716 = vmul.f32 %v665, 1.442695
      %v717 = vpow.pop %v716
      %v718 = vmul.f32 %v666, 1.442695
      %v719 = vpow.pop %v718
      %v720 = vmul.f32 %v667, 1.442695
      %v721 = vpow.pop %v720
      %v722 = vmul.f32 %v668, 1.442695
      %v723 = vpow.pop %v722
      %v724 = vmul.f32 %v669, 1.442695
      %v725 = vpow.pop %v724
      %v726 = vmul.f32 %v670, 1.442695
      %v727 = vpow.pop %v726
      %v728 = vmul.f32 %v671, 1.442695
      %v729 = vpow.pop %v728
      %v730 = vmul.f32 %v672, 1.442695
      %v731 = vpow.pop %v730
      %v732 = vmul.f32 %v673, 1.442695
      %v733 = vpow.pop %v732
      %v734 = vmul.f32 %v674, 1.442695
      %v735 = vpow.pop %v734
      %v736 = vmul.f32 %v675, 1.442695
      %v737 = vpow.pop %v736
      %v738 = vmul.f32 %v676, 1.442695
      %v739 = vpow.pop %v738
      %v740 = vmul.f32 %v677, 1.442695
      %v741 = vpow.pop %v740
      %v742 = vadd.f32 %v679, %v681
      %743 = vadd.xlane.f32.xlu0 %v742
      %v744 = vpop.xlane.xlu0 %743
      %v745 = vadd.f32 %v683, %v685
      %746 = vadd.xlane.f32.xlu0 %v745
      %v747 = vpop.xlane.xlu0 %746
      %v748 = vadd.f32 %v687, %v689
      %749 = vadd.xlane.f32.xlu0 %v748
      %v750 = vpop.xlane.xlu0 %749
      %v751 = vadd.f32 %v691, %v693
      %752 = vadd.xlane.f32.xlu0 %v751
      %v753 = vpop.xlane.xlu0 %752
      %v754 = vadd.f32 %v695, %v697
      %755 = vadd.xlane.f32.xlu0 %v754
      %v756 = vpop.xlane.xlu0 %755
      %v757 = vadd.f32 %v699, %v701
      %758 = vadd.xlane.f32.xlu0 %v757
      %v759 = vpop.xlane.xlu0 %758
      %v760 = vadd.f32 %v703, %v705
      %761 = vadd.xlane.f32.xlu0 %v760
      %v762 = vpop.xlane.xlu0 %761
      %v763 = vadd.f32 %v707, %v709
      %764 = vadd.xlane.f32.xlu0 %v763
      %v765 = vpop.xlane.xlu0 %764
      %v766 = vadd.f32 %v711, %v713
      %767 = vadd.xlane.f32.xlu0 %v766
      %v768 = vpop.xlane.xlu0 %767
      %v769 = vadd.f32 %v715, %v717
      %770 = vadd.xlane.f32.xlu0 %v769
      %v771 = vpop.xlane.xlu0 %770
      %v772 = vadd.f32 %v719, %v721
      %773 = vadd.xlane.f32.xlu0 %v772
      %v774 = vpop.xlane.xlu0 %773
      %v775 = vadd.f32 %v723, %v725
      %776 = vadd.xlane.f32.xlu0 %v775
      %v777 = vpop.xlane.xlu0 %776
      %v778 = vadd.f32 %v727, %v729
      %779 = vadd.xlane.f32.xlu0 %v778
      %v780 = vpop.xlane.xlu0 %779
      %v781 = vadd.f32 %v731, %v733
      %782 = vadd.xlane.f32.xlu0 %v781
      %v783 = vpop.xlane.xlu0 %782
      %v784 = vadd.f32 %v735, %v737
      %785 = vadd.xlane.f32.xlu0 %v784
      %v786 = vpop.xlane.xlu0 %785
      %v787 = vadd.f32 %v739, %v741
      %788 = vadd.xlane.f32.xlu0 %v787
      %v789 = vpop.xlane.xlu0 %788
      %v790 = vrcp.pop %v744
      %v791 = vrcp.pop %v747
      %v792 = vrcp.pop %v750
      %v793 = vrcp.pop %v753
      %v794 = vrcp.pop %v756
      %v795 = vrcp.pop %v759
      %v796 = vrcp.pop %v762
      %v797 = vrcp.pop %v765
      %v798 = vrcp.pop %v768
      %v799 = vrcp.pop %v771
      %v800 = vrcp.pop %v774
      %v801 = vrcp.pop %v777
      %v802 = vrcp.pop %v780
      %v803 = vrcp.pop %v783
      %v804 = vrcp.pop %v786
      %v805 = vrcp.pop %v789
      %v806 = vmul.f32 %v679, %v790
      %v807 = vmul.f32 %v681, %v790
      %v808 = vmul.f32 %v683, %v791
      %v809 = vmul.f32 %v685, %v791
      %v810 = vmul.f32 %v687, %v792
      %v811 = vmul.f32 %v689, %v792
      %v812 = vmul.f32 %v691, %v793
      %v813 = vmul.f32 %v693, %v793
      %v814 = vmul.f32 %v695, %v794
      %v815 = vmul.f32 %v697, %v794
      %v816 = vmul.f32 %v699, %v795
      %v817 = vmul.f32 %v701, %v795
      %v818 = vmul.f32 %v703, %v796
      %v819 = vmul.f32 %v705, %v796
      %v820 = vmul.f32 %v707, %v797
      %v821 = vmul.f32 %v709, %v797
      %v822 = vmul.f32 %v711, %v798
      %v823 = vmul.f32 %v713, %v798
      %v824 = vmul.f32 %v715, %v799
      %v825 = vmul.f32 %v717, %v799
      %v826 = vmul.f32 %v719, %v800
      %v827 = vmul.f32 %v721, %v800
      %v828 = vmul.f32 %v723, %v801
      %v829 = vmul.f32 %v725, %v801
      %v830 = vmul.f32 %v727, %v802
      %v831 = vmul.f32 %v729, %v802
      %v832 = vmul.f32 %v731, %v803
      %v833 = vmul.f32 %v733, %v803
      %v834 = vmul.f32 %v735, %v804
      %v835 = vmul.f32 %v737, %v804
      %v836 = vmul.f32 %v739, %v805
      %v837 = vmul.f32 %v741, %v805
      %v838 = vmax.f32 %v806, %v810
      %v839 = vmax.f32 %v808, %v812
      %v840 = vmax.f32 %v838, %v814
      %v841 = vmax.f32 %v839, %v816
      %v842 = vmax.f32 %v840, %v818
      %v843 = vmax.f32 %v841, %v820
      %v844 = vmax.f32 %v842, %v822
      %v845 = vmax.f32 %v843, %v824
      %v846 = vmax.f32 %v844, %v826
      %v847 = vmax.f32 %v845, %v828
      %v848 = vmax.f32 %v846, %v830
      %v849 = vmax.f32 %v847, %v832
      %v850 = vmax.f32 %v848, %v834
      %v851 = vmax.f32 %v849, %v836
      %v852 = vmax.f32 %v850, %v851
      %v853 = vrot.slane %v852, 4
      %v854 = vmax.f32 %v852, %v853
      %v855 = vrot.slane %v854, 2
      %v856 = vmax.f32 %v854, %v855
      %v857 = vrot.slane %v856, 1
      %v858 = vmax.f32 %v856, %v857
      %v859 = vmax.f32 %v807, %v811
      %v860 = vmax.f32 %v809, %v813
      %v861 = vmax.f32 %v859, %v815
      %v862 = vmax.f32 %v860, %v817
      %v863 = vmax.f32 %v861, %v819
      %v864 = vmax.f32 %v862, %v821
      %v865 = vmax.f32 %v863, %v823
      %v866 = vmax.f32 %v864, %v825
      %v867 = vmax.f32 %v865, %v827
      %v868 = vmax.f32 %v866, %v829
      %v869 = vmax.f32 %v867, %v831
      %v870 = vmax.f32 %v868, %v833
      %v871 = vmax.f32 %v869, %v835
      %v872 = vmax.f32 %v870, %v837
      %v873 = vmax.f32 %v871, %v872
      %v874 = vrot.slane %v873, 4
      %v875 = vmax.f32 %v873, %v874
      %v876 = vrot.slane %v875, 2
      %v877 = vmax.f32 %v875, %v876
      %v878 = vrot.slane %v877, 1
      %v879 = vmax.f32 %v877, %v878
      %v880 = vmax.f32 %v858, 0.0
      %v881 = vmax.f32 %v879, 0.0
      %s882 = scalar_lea.vmem %s151, 4
      %v883 = vld [vmem:[%s882] sm:$0xf]
      %v884 = vsub.f32 %v883, %v171
      %v885 = vmul.f32 %v884, %v884
      %v886 = vsel %vm164, %v885, 0.0
      %v887 = vrot.slane %v886, 4
      %v888 = vadd.f32 %v886, %v887
      %v889 = vrot.slane %v888, 2
      %v890 = vadd.f32 %v888, %v889
      %v891 = vrot.slane %v890, 1
      %v892 = vadd.f32 %v890, %v891
      %v893 = vmax.f32 %v892, 1e-24
      %v894 = vrsqrt.pop %v893
      %v895 = vmul.f32 %v884, %v894
      %896 = vxpose.xlu0.b32.start [1/16] %v895, 128
      %897 = vxpose.xlu0.b32.cont [2/16] 0.0, 128
      %898 = vxpose.xlu0.b32.cont [3/16] 0.0, 128
      %899 = vxpose.xlu0.b32.cont [4/16] 0.0, 128
      %900 = vxpose.xlu0.b32.cont [5/16] 0.0, 128
      %901 = vxpose.xlu0.b32.cont [6/16] 0.0, 128
      %902 = vxpose.xlu0.b32.cont [7/16] 0.0, 128
      %903 = vxpose.xlu0.b32.cont [8/16] 0.0, 128
      %904 = vxpose.xlu0.b32.cont [9/16] 0.0, 128
      %905 = vxpose.xlu0.b32.cont [10/16] 0.0, 128
      %906 = vxpose.xlu0.b32.cont [11/16] 0.0, 128
      %907 = vxpose.xlu0.b32.cont [12/16] 0.0, 128
      %908 = vxpose.xlu0.b32.cont [13/16] 0.0, 128
      %909 = vxpose.xlu0.b32.cont [14/16] 0.0, 128
      %910 = vxpose.xlu0.b32.cont [15/16] 0.0, 128
      %911 = vxpose.xlu0.b32.end [16/16] 0.0, 128
      %v912 = vpop.trf.xlu0
      %v913 = vpop.trf.xlu0
      %v914 = vpop.trf.xlu0
      %v915 = vpop.trf.xlu0
      %v916 = vpop.trf.xlu0
      %v917 = vpop.trf.xlu0
      %v918 = vpop.trf.xlu0
      %v919 = vpop.trf.xlu0
      %v920 = vpop.trf.xlu0
      %v921 = vpop.trf.xlu0
      %v922 = vpop.trf.xlu0
      %v923 = vpop.trf.xlu0
      %v924 = vpop.trf.xlu0
      %v925 = vpop.trf.xlu0
      %v926 = vpop.trf.xlu0
      %v927 = vpop.trf.xlu0
      %v929 = vsel %vm256, %v912, 0
      %v932 = vsel %vm256, %v913, 0
      %v935 = vsel %vm256, %v914, 0
      %v938 = vsel %vm256, %v915, 0
      %v941 = vsel %vm256, %v916, 0
      %v944 = vsel %vm256, %v917, 0
      %v947 = vsel %vm256, %v918, 0
      %v950 = vsel %vm256, %v919, 0
      %v953 = vsel %vm256, %v920, 0
      %v956 = vsel %vm256, %v921, 0
      %v959 = vsel %vm256, %v922, 0
      %v962 = vsel %vm256, %v923, 0
      %v965 = vsel %vm256, %v924, 0
      %v968 = vsel %vm256, %v925, 0
      %v971 = vsel %vm256, %v926, 0
      %v974 = vsel %vm256, %v927, 0
      %976 = vmatprep.subr.mxu0 %v307
      %977 = vmatpush1.msra.mxu0 %v305
      %978 = vmatprep.subr.mxu0 0.0
      %979 = vmatpush1.msra.mxu0 0.0
      %980 = vmatprep.subr.mxu0 0.0
      %981 = vmatpush1.msra.mxu0 0.0
      %982 = vmatprep.subr.mxu0 0.0
      %983 = vmatpush1.msra.mxu0 0.0
      %984 = vmatprep.subr.mxu0 0.0
      %985 = vmatpush1.msra.mxu0 0.0
      %986 = vmatprep.subr.mxu0 0.0
      %987 = vmatpush1.msra.mxu0 0.0
      %988 = vmatprep.subr.mxu0 0.0
      %989 = vmatpush1.msra.mxu0 0.0
      %990 = vmatprep.subr.mxu0 0.0
      %991 = vmatpush1.msra.mxu0 0.0
      %992 = vmatprep.subr.mxu0 0.0
      %993 = vmatpush1.msra.mxu0 0.0
      %994 = vmatprep.subr.mxu0 0.0
      %995 = vmatpush1.msra.mxu0 0.0
      %996 = vmatprep.subr.mxu0 0.0
      %997 = vmatpush1.msra.mxu0 0.0
      %998 = vmatprep.subr.mxu0 0.0
      %999 = vmatpush1.msra.mxu0 0.0
      %1000 = vmatprep.subr.mxu0 0.0
      %1001 = vmatpush1.msra.mxu0 0.0
      %1002 = vmatprep.subr.mxu0 0.0
      %1003 = vmatpush1.msra.mxu0 0.0
      %1004 = vmatprep.subr.mxu0 0.0
      %1005 = vmatpush1.msra.mxu0 0.0
      %1006 = vmatprep.subr.mxu0 0.0
      %1007 = vmatpush1.msra.mxu0 0.0
      %1008 = vmatprep.subr.mxu0 0.0
      %1009 = vmatpush1.msra.mxu0 0.0
      %1010 = vmatprep.subr.mxu0 0.0
      %1011 = vmatpush1.msra.mxu0 0.0
      %1012 = vmatprep.subr.mxu0 0.0
      %1013 = vmatpush1.msra.mxu0 0.0
      %1014 = vmatprep.subr.mxu0 0.0
      %1015 = vmatpush1.msra.mxu0 0.0
      %1016 = vmatprep.subr.mxu0 0.0
      %1017 = vmatpush1.msra.mxu0 0.0
      %1018 = vmatprep.subr.mxu0 0.0
      %1019 = vmatpush1.msra.mxu0 0.0
      %1020 = vmatprep.subr.mxu0 0.0
      %1021 = vmatpush1.msra.mxu0 0.0
      %1022 = vmatprep.subr.mxu0 0.0
      %1023 = vmatpush1.msra.mxu0 0.0
      %1024 = vmatprep.subr.mxu0 0.0
      %1025 = vmatpush1.msra.mxu0 0.0
      %1026 = vmatprep.subr.mxu0 0.0
      %1027 = vmatpush1.msra.mxu0 0.0
      %1028 = vmatprep.subr.mxu0 0.0
      %1029 = vmatpush1.msra.mxu0 0.0
      %1030 = vmatprep.subr.mxu0 0.0
      %1031 = vmatpush1.msra.mxu0 0.0
      %1032 = vmatprep.subr.mxu0 0.0
      %1033 = vmatpush1.msra.mxu0 0.0
      %1034 = vmatprep.subr.mxu0 0.0
      %1035 = vmatpush1.msra.mxu0 0.0
      %1036 = vmatprep.subr.mxu0 0.0
      %1037 = vmatpush1.msra.mxu0 0.0
      %1038 = vmatprep.subr.mxu0 0.0
      %1039 = vmatpush1.msra.mxu0 0.0
      %1040 = vmatprep.mubr.f32.mxu0 0.0
      %1041 = vmatmul.mubr.f32.gmra.mrb[0].mxu0 %v929
      %v1042 = vpop.f32.mrb[0].mxu0
      %v1043 = vadd.f32 0.0, %v1042
      %v1044 = vpop.f32.mrb[0].mxu0
      %v1045 = vadd.f32 0.0, %v1044
      %1046 = vmatprep.mubr.f32.mxu0 0.0
      %1047 = vmatmul.mubr.f32.gmra.mrb[0].mxu0 %v932
      %v1048 = vpop.f32.mrb[0].mxu0
      %v1049 = vadd.f32 0.0, %v1048
      %v1050 = vpop.f32.mrb[0].mxu0
      %v1051 = vadd.f32 0.0, %v1050
      %1052 = vmatprep.mubr.f32.mxu0 0.0
      %1053 = vmatmul.mubr.f32.gmra.mrb[0].mxu0 %v935
      %v1054 = vpop.f32.mrb[0].mxu0
      %v1055 = vadd.f32 0.0, %v1054
      %v1056 = vpop.f32.mrb[0].mxu0
      %v1057 = vadd.f32 0.0, %v1056
      %1058 = vmatprep.mubr.f32.mxu0 0.0
      %1059 = vmatmul.mubr.f32.gmra.mrb[0].mxu0 %v938
      %v1060 = vpop.f32.mrb[0].mxu0
      %v1061 = vadd.f32 0.0, %v1060
      %v1062 = vpop.f32.mrb[0].mxu0
      %v1063 = vadd.f32 0.0, %v1062
      %1064 = vmatprep.mubr.f32.mxu0 0.0
      %1065 = vmatmul.mubr.f32.gmra.mrb[0].mxu0 %v941
      %v1066 = vpop.f32.mrb[0].mxu0
      %v1067 = vadd.f32 0.0, %v1066
      %v1068 = vpop.f32.mrb[0].mxu0
      %v1069 = vadd.f32 0.0, %v1068
      %1070 = vmatprep.mubr.f32.mxu0 0.0
      %1071 = vmatmul.mubr.f32.gmra.mrb[0].mxu0 %v944
      %v1072 = vpop.f32.mrb[0].mxu0
      %v1073 = vadd.f32 0.0, %v1072
      %v1074 = vpop.f32.mrb[0].mxu0
      %v1075 = vadd.f32 0.0, %v1074
      %1076 = vmatprep.mubr.f32.mxu0 0.0
      %1077 = vmatmul.mubr.f32.gmra.mrb[0].mxu0 %v947
      %v1078 = vpop.f32.mrb[0].mxu0
      %v1079 = vadd.f32 0.0, %v1078
      %v1080 = vpop.f32.mrb[0].mxu0
      %v1081 = vadd.f32 0.0, %v1080
      %1082 = vmatprep.mubr.f32.mxu0 0.0
      %1083 = vmatmul.mubr.f32.gmra.mrb[0].mxu0 %v950
      %v1084 = vpop.f32.mrb[0].mxu0
      %v1085 = vadd.f32 0.0, %v1084
      %v1086 = vpop.f32.mrb[0].mxu0
      %v1087 = vadd.f32 0.0, %v1086
      %1088 = vmatprep.mubr.f32.mxu0 0.0
      %1089 = vmatmul.mubr.f32.gmra.mrb[0].mxu0 %v953
      %v1090 = vpop.f32.mrb[0].mxu0
      %v1091 = vadd.f32 0.0, %v1090
      %v1092 = vpop.f32.mrb[0].mxu0
      %v1093 = vadd.f32 0.0, %v1092
      %1094 = vmatprep.mubr.f32.mxu0 0.0
      %1095 = vmatmul.mubr.f32.gmra.mrb[0].mxu0 %v956
      %v1096 = vpop.f32.mrb[0].mxu0
      %v1097 = vadd.f32 0.0, %v1096
      %v1098 = vpop.f32.mrb[0].mxu0
      %v1099 = vadd.f32 0.0, %v1098
      %1100 = vmatprep.mubr.f32.mxu0 0.0
      %1101 = vmatmul.mubr.f32.gmra.mrb[0].mxu0 %v959
      %v1102 = vpop.f32.mrb[0].mxu0
      %v1103 = vadd.f32 0.0, %v1102
      %v1104 = vpop.f32.mrb[0].mxu0
      %v1105 = vadd.f32 0.0, %v1104
      %1106 = vmatprep.mubr.f32.mxu0 0.0
      %1107 = vmatmul.mubr.f32.gmra.mrb[0].mxu0 %v962
      %v1108 = vpop.f32.mrb[0].mxu0
      %v1109 = vadd.f32 0.0, %v1108
      %v1110 = vpop.f32.mrb[0].mxu0
      %v1111 = vadd.f32 0.0, %v1110
      %1112 = vmatprep.mubr.f32.mxu0 0.0
      %1113 = vmatmul.mubr.f32.gmra.mrb[0].mxu0 %v965
      %v1114 = vpop.f32.mrb[0].mxu0
      %v1115 = vadd.f32 0.0, %v1114
      %v1116 = vpop.f32.mrb[0].mxu0
      %v1117 = vadd.f32 0.0, %v1116
      %1118 = vmatprep.mubr.f32.mxu0 0.0
      %1119 = vmatmul.mubr.f32.gmra.mrb[0].mxu0 %v968
      %v1120 = vpop.f32.mrb[0].mxu0
      %v1121 = vadd.f32 0.0, %v1120
      %v1122 = vpop.f32.mrb[0].mxu0
      %v1123 = vadd.f32 0.0, %v1122
      %1124 = vmatprep.mubr.f32.mxu0 0.0
      %1125 = vmatmul.mubr.f32.gmra.mrb[0].mxu0 %v971
      %v1126 = vpop.f32.mrb[0].mxu0
      %v1127 = vadd.f32 0.0, %v1126
      %v1128 = vpop.f32.mrb[0].mxu0
      %v1129 = vadd.f32 0.0, %v1128
      %1130 = vmatprep.mubr.f32.mxu0 0.0
      %1131 = vmatmul.mubr.f32.gmra.mrb[0].mxu0 %v974
      %v1132 = vpop.f32.mrb[0].mxu0
      %v1133 = vadd.f32 0.0, %v1132
      %v1134 = vpop.f32.mrb[0].mxu0
      %v1135 = vadd.f32 0.0, %v1134
      %1136 = vdwg.mxu0
      %v1137 = vmax.f32 %v1043, %v1045
      %1138 = vmax.xlane.f32.xlu0 %v1137
      %v1139 = vpop.xlane.xlu0 %1138
      %v1140 = vmax.f32 %v1049, %v1051
      %1141 = vmax.xlane.f32.xlu0 %v1140
      %v1142 = vpop.xlane.xlu0 %1141
      %v1143 = vmax.f32 %v1055, %v1057
      %1144 = vmax.xlane.f32.xlu0 %v1143
      %v1145 = vpop.xlane.xlu0 %1144
      %v1146 = vmax.f32 %v1061, %v1063
      %1147 = vmax.xlane.f32.xlu0 %v1146
      %v1148 = vpop.xlane.xlu0 %1147
      %v1149 = vmax.f32 %v1067, %v1069
      %1150 = vmax.xlane.f32.xlu0 %v1149
      %v1151 = vpop.xlane.xlu0 %1150
      %v1152 = vmax.f32 %v1073, %v1075
      %1153 = vmax.xlane.f32.xlu0 %v1152
      %v1154 = vpop.xlane.xlu0 %1153
      %v1155 = vmax.f32 %v1079, %v1081
      %1156 = vmax.xlane.f32.xlu0 %v1155
      %v1157 = vpop.xlane.xlu0 %1156
      %v1158 = vmax.f32 %v1085, %v1087
      %1159 = vmax.xlane.f32.xlu0 %v1158
      %v1160 = vpop.xlane.xlu0 %1159
      %v1161 = vmax.f32 %v1091, %v1093
      %1162 = vmax.xlane.f32.xlu0 %v1161
      %v1163 = vpop.xlane.xlu0 %1162
      %v1164 = vmax.f32 %v1097, %v1099
      %1165 = vmax.xlane.f32.xlu0 %v1164
      %v1166 = vpop.xlane.xlu0 %1165
      %v1167 = vmax.f32 %v1103, %v1105
      %1168 = vmax.xlane.f32.xlu0 %v1167
      %v1169 = vpop.xlane.xlu0 %1168
      %v1170 = vmax.f32 %v1109, %v1111
      %1171 = vmax.xlane.f32.xlu0 %v1170
      %v1172 = vpop.xlane.xlu0 %1171
      %v1173 = vmax.f32 %v1115, %v1117
      %1174 = vmax.xlane.f32.xlu0 %v1173
      %v1175 = vpop.xlane.xlu0 %1174
      %v1176 = vmax.f32 %v1121, %v1123
      %1177 = vmax.xlane.f32.xlu0 %v1176
      %v1178 = vpop.xlane.xlu0 %1177
      %v1179 = vmax.f32 %v1127, %v1129
      %1180 = vmax.xlane.f32.xlu0 %v1179
      %v1181 = vpop.xlane.xlu0 %1180
      %v1182 = vmax.f32 %v1133, %v1135
      %1183 = vmax.xlane.f32.xlu0 %v1182
      %v1184 = vpop.xlane.xlu0 %1183
      %v1185 = vsub.f32 1.0, %v1139
      %v1186 = vsub.f32 1.0, %v1142
      %v1187 = vsub.f32 1.0, %v1145
      %v1188 = vsub.f32 1.0, %v1148
      %v1189 = vsub.f32 1.0, %v1151
      %v1190 = vsub.f32 1.0, %v1154
      %v1191 = vsub.f32 1.0, %v1157
      %v1192 = vsub.f32 1.0, %v1160
      %v1193 = vsub.f32 1.0, %v1163
      %v1194 = vsub.f32 1.0, %v1166
      %v1195 = vsub.f32 1.0, %v1169
      %v1196 = vsub.f32 1.0, %v1172
      %v1197 = vsub.f32 1.0, %v1175
      %v1198 = vsub.f32 1.0, %v1178
      %v1199 = vsub.f32 1.0, %v1181
      %v1200 = vsub.f32 1.0, %v1184
      %v1201 = vmax.f32 %v1185, 0.0
      %v1202 = vmax.f32 %v1186, 0.0
      %v1203 = vmax.f32 %v1187, 0.0
      %v1204 = vmax.f32 %v1188, 0.0
      %v1205 = vmax.f32 %v1189, 0.0
      %v1206 = vmax.f32 %v1190, 0.0
      %v1207 = vmax.f32 %v1191, 0.0
      %v1208 = vmax.f32 %v1192, 0.0
      %v1209 = vmax.f32 %v1193, 0.0
      %v1210 = vmax.f32 %v1194, 0.0
      %v1211 = vmax.f32 %v1195, 0.0
      %v1212 = vmax.f32 %v1196, 0.0
      %v1213 = vmax.f32 %v1197, 0.0
      %v1214 = vmax.f32 %v1198, 0.0
      %v1215 = vmax.f32 %v1199, 0.0
      %v1216 = vmax.f32 %v1200, 0.0
      %v1217 = vadd.f32 %v1201, 1e-05
      %v1218 = vadd.f32 %v1202, 1e-05
      %v1219 = vadd.f32 %v1203, 1e-05
      %v1220 = vadd.f32 %v1204, 1e-05
      %v1221 = vadd.f32 %v1205, 1e-05
      %v1222 = vadd.f32 %v1206, 1e-05
      %v1223 = vadd.f32 %v1207, 1e-05
      %v1224 = vadd.f32 %v1208, 1e-05
      %v1225 = vadd.f32 %v1209, 1e-05
      %v1226 = vadd.f32 %v1210, 1e-05
      %v1227 = vadd.f32 %v1211, 1e-05
      %v1228 = vadd.f32 %v1212, 1e-05
      %v1229 = vadd.f32 %v1213, 1e-05
      %v1230 = vadd.f32 %v1214, 1e-05
      %v1231 = vadd.f32 %v1215, 1e-05
      %v1232 = vadd.f32 %v1216, 1e-05
      %v1233 = vrcp.pop %v1217
      %v1234 = vrcp.pop %v1218
      %v1235 = vrcp.pop %v1219
      %v1236 = vrcp.pop %v1220
      %v1237 = vrcp.pop %v1221
      %v1238 = vrcp.pop %v1222
      %v1239 = vrcp.pop %v1223
      %v1240 = vrcp.pop %v1224
      %v1241 = vrcp.pop %v1225
      %v1242 = vrcp.pop %v1226
      %v1243 = vrcp.pop %v1227
      %v1244 = vrcp.pop %v1228
      %v1245 = vrcp.pop %v1229
      %v1246 = vrcp.pop %v1230
      %v1247 = vrcp.pop %v1231
      %v1248 = vrcp.pop %v1232
      %v1249 = vmul.f32 %v1233, 2.0
      %v1250 = vmul.f32 %v1234, 2.0
      %v1251 = vmul.f32 %v1235, 2.0
      %v1252 = vmul.f32 %v1236, 2.0
      %v1253 = vmul.f32 %v1237, 2.0
      %v1254 = vmul.f32 %v1238, 2.0
      %v1255 = vmul.f32 %v1239, 2.0
      %v1256 = vmul.f32 %v1240, 2.0
      %v1257 = vmul.f32 %v1241, 2.0
      %v1258 = vmul.f32 %v1242, 2.0
      %v1259 = vmul.f32 %v1243, 2.0
      %v1260 = vmul.f32 %v1244, 2.0
      %v1261 = vmul.f32 %v1245, 2.0
      %v1262 = vmul.f32 %v1246, 2.0
      %v1263 = vmul.f32 %v1247, 2.0
      %v1264 = vmul.f32 %v1248, 2.0
      %v1265 = vsub.f32 0.0, %v1249
      %v1266 = vsub.f32 0.0, %v1250
      %v1267 = vsub.f32 0.0, %v1251
      %v1268 = vsub.f32 0.0, %v1252
      %v1269 = vsub.f32 0.0, %v1253
      %v1270 = vsub.f32 0.0, %v1254
      %v1271 = vsub.f32 0.0, %v1255
      %v1272 = vsub.f32 0.0, %v1256
      %v1273 = vsub.f32 0.0, %v1257
      %v1274 = vsub.f32 0.0, %v1258
      %v1275 = vsub.f32 0.0, %v1259
      %v1276 = vsub.f32 0.0, %v1260
      %v1277 = vsub.f32 0.0, %v1261
      %v1278 = vsub.f32 0.0, %v1262
      %v1279 = vsub.f32 0.0, %v1263
      %v1280 = vsub.f32 0.0, %v1264
      %v1281 = vmul.f32 %v1043, %v1249
      %v1282 = vmul.f32 %v1045, %v1249
      %v1283 = vmul.f32 %v1049, %v1250
      %v1284 = vmul.f32 %v1051, %v1250
      %v1285 = vmul.f32 %v1055, %v1251
      %v1286 = vmul.f32 %v1057, %v1251
      %v1287 = vmul.f32 %v1061, %v1252
      %v1288 = vmul.f32 %v1063, %v1252
      %v1289 = vmul.f32 %v1067, %v1253
      %v1290 = vmul.f32 %v1069, %v1253
      %v1291 = vmul.f32 %v1073, %v1254
      %v1292 = vmul.f32 %v1075, %v1254
      %v1293 = vmul.f32 %v1079, %v1255
      %v1294 = vmul.f32 %v1081, %v1255
      %v1295 = vmul.f32 %v1085, %v1256
      %v1296 = vmul.f32 %v1087, %v1256
      %v1297 = vmul.f32 %v1091, %v1257
      %v1298 = vmul.f32 %v1093, %v1257
      %v1299 = vmul.f32 %v1097, %v1258
      %v1300 = vmul.f32 %v1099, %v1258
      %v1301 = vmul.f32 %v1103, %v1259
      %v1302 = vmul.f32 %v1105, %v1259
      %v1303 = vmul.f32 %v1109, %v1260
      %v1304 = vmul.f32 %v1111, %v1260
      %v1305 = vmul.f32 %v1115, %v1261
      %v1306 = vmul.f32 %v1117, %v1261
      %v1307 = vmul.f32 %v1121, %v1262
      %v1308 = vmul.f32 %v1123, %v1262
      %v1309 = vmul.f32 %v1127, %v1263
      %v1310 = vmul.f32 %v1129, %v1263
      %v1311 = vmul.f32 %v1133, %v1264
      %v1312 = vmul.f32 %v1135, %v1264
      %v1313 = vadd.f32 %v1281, %v1265
      %v1314 = vadd.f32 %v1282, %v1265
      %v1315 = vadd.f32 %v1283, %v1266
      %v1316 = vadd.f32 %v1284, %v1266
      %v1317 = vadd.f32 %v1285, %v1267
      %v1318 = vadd.f32 %v1286, %v1267
      %v1319 = vadd.f32 %v1287, %v1268
      %v1320 = vadd.f32 %v1288, %v1268
      %v1321 = vadd.f32 %v1289, %v1269
      %v1322 = vadd.f32 %v1290, %v1269
      %v1323 = vadd.f32 %v1291, %v1270
      %v1324 = vadd.f32 %v1292, %v1270
      %v1325 = vadd.f32 %v1293, %v1271
      %v1326 = vadd.f32 %v1294, %v1271
      %v1327 = vadd.f32 %v1295, %v1272
      %v1328 = vadd.f32 %v1296, %v1272
      %v1329 = vadd.f32 %v1297, %v1273
      %v1330 = vadd.f32 %v1298, %v1273
      %v1331 = vadd.f32 %v1299, %v1274
      %v1332 = vadd.f32 %v1300, %v1274
      %v1333 = vadd.f32 %v1301, %v1275
      %v1334 = vadd.f32 %v1302, %v1275
      %v1335 = vadd.f32 %v1303, %v1276
      %v1336 = vadd.f32 %v1304, %v1276
      %v1337 = vadd.f32 %v1305, %v1277
      %v1338 = vadd.f32 %v1306, %v1277
      %v1339 = vadd.f32 %v1307, %v1278
      %v1340 = vadd.f32 %v1308, %v1278
      %v1341 = vadd.f32 %v1309, %v1279
      %v1342 = vadd.f32 %v1310, %v1279
      %v1343 = vadd.f32 %v1311, %v1280
      %v1344 = vadd.f32 %v1312, %v1280
      %v1345 = vmul.f32 %v1313, 1.442695
      %v1346 = vpow.pop %v1345
      %v1347 = vmul.f32 %v1314, 1.442695
      %v1348 = vpow.pop %v1347
      %v1349 = vmul.f32 %v1315, 1.442695
      %v1350 = vpow.pop %v1349
      %v1351 = vmul.f32 %v1316, 1.442695
      %v1352 = vpow.pop %v1351
      %v1353 = vmul.f32 %v1317, 1.442695
      %v1354 = vpow.pop %v1353
      %v1355 = vmul.f32 %v1318, 1.442695
      %v1356 = vpow.pop %v1355
      %v1357 = vmul.f32 %v1319, 1.442695
      %v1358 = vpow.pop %v1357
      %v1359 = vmul.f32 %v1320, 1.442695
      %v1360 = vpow.pop %v1359
      %v1361 = vmul.f32 %v1321, 1.442695
      %v1362 = vpow.pop %v1361
      %v1363 = vmul.f32 %v1322, 1.442695
      %v1364 = vpow.pop %v1363
      %v1365 = vmul.f32 %v1323, 1.442695
      %v1366 = vpow.pop %v1365
      %v1367 = vmul.f32 %v1324, 1.442695
      %v1368 = vpow.pop %v1367
      %v1369 = vmul.f32 %v1325, 1.442695
      %v1370 = vpow.pop %v1369
      %v1371 = vmul.f32 %v1326, 1.442695
      %v1372 = vpow.pop %v1371
      %v1373 = vmul.f32 %v1327, 1.442695
      %v1374 = vpow.pop %v1373
      %v1375 = vmul.f32 %v1328, 1.442695
      %v1376 = vpow.pop %v1375
      %v1377 = vmul.f32 %v1329, 1.442695
      %v1378 = vpow.pop %v1377
      %v1379 = vmul.f32 %v1330, 1.442695
      %v1380 = vpow.pop %v1379
      %v1381 = vmul.f32 %v1331, 1.442695
      %v1382 = vpow.pop %v1381
      %v1383 = vmul.f32 %v1332, 1.442695
      %v1384 = vpow.pop %v1383
      %v1385 = vmul.f32 %v1333, 1.442695
      %v1386 = vpow.pop %v1385
      %v1387 = vmul.f32 %v1334, 1.442695
      %v1388 = vpow.pop %v1387
      %v1389 = vmul.f32 %v1335, 1.442695
      %v1390 = vpow.pop %v1389
      %v1391 = vmul.f32 %v1336, 1.442695
      %v1392 = vpow.pop %v1391
      %v1393 = vmul.f32 %v1337, 1.442695
      %v1394 = vpow.pop %v1393
      %v1395 = vmul.f32 %v1338, 1.442695
      %v1396 = vpow.pop %v1395
      %v1397 = vmul.f32 %v1339, 1.442695
      %v1398 = vpow.pop %v1397
      %v1399 = vmul.f32 %v1340, 1.442695
      %v1400 = vpow.pop %v1399
      %v1401 = vmul.f32 %v1341, 1.442695
      %v1402 = vpow.pop %v1401
      %v1403 = vmul.f32 %v1342, 1.442695
      %v1404 = vpow.pop %v1403
      %v1405 = vmul.f32 %v1343, 1.442695
      %v1406 = vpow.pop %v1405
      %v1407 = vmul.f32 %v1344, 1.442695
      %v1408 = vpow.pop %v1407
      %v1409 = vadd.f32 %v1346, %v1348
      %1410 = vadd.xlane.f32.xlu0 %v1409
      %v1411 = vpop.xlane.xlu0 %1410
      %v1412 = vadd.f32 %v1350, %v1352
      %1413 = vadd.xlane.f32.xlu0 %v1412
      %v1414 = vpop.xlane.xlu0 %1413
      %v1415 = vadd.f32 %v1354, %v1356
      %1416 = vadd.xlane.f32.xlu0 %v1415
      %v1417 = vpop.xlane.xlu0 %1416
      %v1418 = vadd.f32 %v1358, %v1360
      %1419 = vadd.xlane.f32.xlu0 %v1418
      %v1420 = vpop.xlane.xlu0 %1419
      %v1421 = vadd.f32 %v1362, %v1364
      %1422 = vadd.xlane.f32.xlu0 %v1421
      %v1423 = vpop.xlane.xlu0 %1422
      %v1424 = vadd.f32 %v1366, %v1368
      %1425 = vadd.xlane.f32.xlu0 %v1424
      %v1426 = vpop.xlane.xlu0 %1425
      %v1427 = vadd.f32 %v1370, %v1372
      %1428 = vadd.xlane.f32.xlu0 %v1427
      %v1429 = vpop.xlane.xlu0 %1428
      %v1430 = vadd.f32 %v1374, %v1376
      %1431 = vadd.xlane.f32.xlu0 %v1430
      %v1432 = vpop.xlane.xlu0 %1431
      %v1433 = vadd.f32 %v1378, %v1380
      %1434 = vadd.xlane.f32.xlu0 %v1433
      %v1435 = vpop.xlane.xlu0 %1434
      %v1436 = vadd.f32 %v1382, %v1384
      %1437 = vadd.xlane.f32.xlu0 %v1436
      %v1438 = vpop.xlane.xlu0 %1437
      %v1439 = vadd.f32 %v1386, %v1388
      %1440 = vadd.xlane.f32.xlu0 %v1439
      %v1441 = vpop.xlane.xlu0 %1440
      %v1442 = vadd.f32 %v1390, %v1392
      %1443 = vadd.xlane.f32.xlu0 %v1442
      %v1444 = vpop.xlane.xlu0 %1443
      %v1445 = vadd.f32 %v1394, %v1396
      %1446 = vadd.xlane.f32.xlu0 %v1445
      %v1447 = vpop.xlane.xlu0 %1446
      %v1448 = vadd.f32 %v1398, %v1400
      %1449 = vadd.xlane.f32.xlu0 %v1448
      %v1450 = vpop.xlane.xlu0 %1449
      %v1451 = vadd.f32 %v1402, %v1404
      %1452 = vadd.xlane.f32.xlu0 %v1451
      %v1453 = vpop.xlane.xlu0 %1452
      %v1454 = vadd.f32 %v1406, %v1408
      %1455 = vadd.xlane.f32.xlu0 %v1454
      %v1456 = vpop.xlane.xlu0 %1455
      %v1457 = vrcp.pop %v1411
      %v1458 = vrcp.pop %v1414
      %v1459 = vrcp.pop %v1417
      %v1460 = vrcp.pop %v1420
      %v1461 = vrcp.pop %v1423
      %v1462 = vrcp.pop %v1426
      %v1463 = vrcp.pop %v1429
      %v1464 = vrcp.pop %v1432
      %v1465 = vrcp.pop %v1435
      %v1466 = vrcp.pop %v1438
      %v1467 = vrcp.pop %v1441
      %v1468 = vrcp.pop %v1444
      %v1469 = vrcp.pop %v1447
      %v1470 = vrcp.pop %v1450
      %v1471 = vrcp.pop %v1453
      %v1472 = vrcp.pop %v1456
      %v1473 = vmul.f32 %v1346, %v1457
      %v1474 = vmul.f32 %v1348, %v1457
      %v1475 = vmul.f32 %v1350, %v1458
      %v1476 = vmul.f32 %v1352, %v1458
      %v1477 = vmul.f32 %v1354, %v1459
      %v1478 = vmul.f32 %v1356, %v1459
      %v1479 = vmul.f32 %v1358, %v1460
      %v1480 = vmul.f32 %v1360, %v1460
      %v1481 = vmul.f32 %v1362, %v1461
      %v1482 = vmul.f32 %v1364, %v1461
      %v1483 = vmul.f32 %v1366, %v1462
      %v1484 = vmul.f32 %v1368, %v1462
      %v1485 = vmul.f32 %v1370, %v1463
      %v1486 = vmul.f32 %v1372, %v1463
      %v1487 = vmul.f32 %v1374, %v1464
      %v1488 = vmul.f32 %v1376, %v1464
      %v1489 = vmul.f32 %v1378, %v1465
      %v1490 = vmul.f32 %v1380, %v1465
      %v1491 = vmul.f32 %v1382, %v1466
      %v1492 = vmul.f32 %v1384, %v1466
      %v1493 = vmul.f32 %v1386, %v1467
      %v1494 = vmul.f32 %v1388, %v1467
      %v1495 = vmul.f32 %v1390, %v1468
      %v1496 = vmul.f32 %v1392, %v1468
      %v1497 = vmul.f32 %v1394, %v1469
      %v1498 = vmul.f32 %v1396, %v1469
      %v1499 = vmul.f32 %v1398, %v1470
      %v1500 = vmul.f32 %v1400, %v1470
      %v1501 = vmul.f32 %v1402, %v1471
      %v1502 = vmul.f32 %v1404, %v1471
      %v1503 = vmul.f32 %v1406, %v1472
      %v1504 = vmul.f32 %v1408, %v1472
      %v1505 = vmax.f32 %v1473, %v1477
      %v1506 = vmax.f32 %v1475, %v1479
      %v1507 = vmax.f32 %v1505, %v1481
      %v1508 = vmax.f32 %v1506, %v1483
      %v1509 = vmax.f32 %v1507, %v1485
      %v1510 = vmax.f32 %v1508, %v1487
      %v1511 = vmax.f32 %v1509, %v1489
      %v1512 = vmax.f32 %v1510, %v1491
      %v1513 = vmax.f32 %v1511, %v1493
      %v1514 = vmax.f32 %v1512, %v1495
      %v1515 = vmax.f32 %v1513, %v1497
      %v1516 = vmax.f32 %v1514, %v1499
      %v1517 = vmax.f32 %v1515, %v1501
      %v1518 = vmax.f32 %v1516, %v1503
      %v1519 = vmax.f32 %v1517, %v1518
      %v1520 = vrot.slane %v1519, 4
      %v1521 = vmax.f32 %v1519, %v1520
      %v1522 = vrot.slane %v1521, 2
      %v1523 = vmax.f32 %v1521, %v1522
      %v1524 = vrot.slane %v1523, 1
      %v1525 = vmax.f32 %v1523, %v1524
      %v1526 = vmax.f32 %v1474, %v1478
      %v1527 = vmax.f32 %v1476, %v1480
      %v1528 = vmax.f32 %v1526, %v1482
      %v1529 = vmax.f32 %v1527, %v1484
      %v1530 = vmax.f32 %v1528, %v1486
      %v1531 = vmax.f32 %v1529, %v1488
      %v1532 = vmax.f32 %v1530, %v1490
      %v1533 = vmax.f32 %v1531, %v1492
      %v1534 = vmax.f32 %v1532, %v1494
      %v1535 = vmax.f32 %v1533, %v1496
      %v1536 = vmax.f32 %v1534, %v1498
      %v1537 = vmax.f32 %v1535, %v1500
      %v1538 = vmax.f32 %v1536, %v1502
      %v1539 = vmax.f32 %v1537, %v1504
      %v1540 = vmax.f32 %v1538, %v1539
      %v1541 = vrot.slane %v1540, 4
      %v1542 = vmax.f32 %v1540, %v1541
      %v1543 = vrot.slane %v1542, 2
      %v1544 = vmax.f32 %v1542, %v1543
      %v1545 = vrot.slane %v1544, 1
      %v1546 = vmax.f32 %v1544, %v1545
      %v1547 = vmax.f32 %v880, %v1525
      %v1548 = vmax.f32 %v881, %v1546
      %vm1549 = vcmask 1040384
      %v1550 = vsel %vm1549, %v1547, 0.0
      %v1551 = vsel %vm1549, %v1548, 0.0
      %v1552 = vadd.f32 %v1550, %v1551
      %1553 = vadd.xlane.f32.xlu0 %v1552
      %v1554 = vpop.xlane.xlu0 %1553
      %v1555 = vrot.slane %v1554, 4
      %v1556 = vadd.f32 %v1554, %v1555
      %v1557 = vrot.slane %v1556, 2
      %v1558 = vadd.f32 %v1556, %v1557
      %v1559 = vrot.slane %v1558, 1
      %v1560 = vadd.f32 %v1558, %v1559
      %s1561 = vtos %v1560
      %s1562 = smul.f32 %s1561, 0.00390625
      %v1563 = vstv %s1562
      %1564 = vst [vmem:[%s159] sm:$0x1] %v1563
      %p1565 = scmp.lt.s32.totalorder %s13, 19
      %s1566 = scalar_select %p1565, %s13, 19
      %s1567 = scalar_lea.vmem %s2, %s1566
      // Predicated region
      $region29: #{_lambda_.1} parent=27 // pred_check
        %p1568 = pneg %p83
      $region30: #{_lambda_.1} parent=27 // pred_check_branch
        %1570 = sbr.rel (%p1568) target = $region32
      $region31: #{_lambda_.1} parent=27 // pred_region
        _
      $region32: #{_lambda_.1} parent=27 // pred_fallthru
        _
    $region28: #{_lambda_.1} parent=5 // pred_fallthru
      _
    %p1571 = scmp.le.s32.totalorder 2, %s8
    // Predicated region
    $region33: #{_lambda_.1} parent=5 // pred_check
      %p1572 = pneg %p1571
    $region34: #{_lambda_.1} parent=5 // pred_check_branch
      %1574 = sbr.rel (%p1572) target = $region36
    $region35: #{_lambda_.1} parent=5 // pred_region
      %s1575 = ssub.s32 %s8, 2
      // Predicated region
      $region37: #{_lambda_.1} parent=35 // pred_check
        %p1576 = pneg %p89
      $region38: #{_lambda_.1} parent=35 // pred_check_branch
        %1578 = sbr.rel (%p1576) target = $region40
      $region39: #{_lambda_.1} parent=35 // pred_region
        %p1579 = scmp.lt.s32.totalorder %s14, 19
        %s1580 = scalar_select %p1579, %s14, 19
        %s1581 = scalar_lea.vmem %s2, %s1580
      $region40: #{_lambda_.1} parent=35 // pred_fallthru
        _
    $region36: #{_lambda_.1} parent=5 // pred_fallthru
      _
  $region6: #{_lambda_.1} parent=0 // loop_footer
    %s12 = sadd.s32 1, %s8
  $region7: #{_lambda_.1} parent=0 // loop_footer_branch
    %7 = sbr.rel target = $region3
  $region8: #{_lambda_.1} parent=0 // loop_exit
    _

</llo_original>
